<compile_context>
chip_gen: v5e
topology: v5e:2x2
jax: 0.10.0
libtpu: 0.0.40
codegen_flags: <defaults>
</compile_context>

<pallas_src>
import functools
import math

import jax
import jax.numpy as jnp
from jax import lax
from jax.experimental import pallas as pl
from jax.experimental.pallas import tpu as pltpu


# ----------------------------------------------------------------------------- hw info
def _device_kind():
    try:
        return jax.devices()[0].device_kind.lower()
    except Exception:
        return ""


def _vmem_capacity_bytes(kind):
    try:
        return int(pltpu.get_tpu_info().vmem_capacity_bytes)
    except Exception:
        return (64 << 20) if ("v7" in kind or "7x" in kind) else (128 << 20)


# ----------------------------------------------------------------------------- kernel
def _mixed_score_attention_kernel(q_ref, k_ref, v_ref, dmat_ref,
                                  w1s_ref, w1d_ref, b1_ref, w2_ref, o_ref,
                                  *, num_heads, head_dim, mix_dtype, dmat_transposed):
    # q_ref:    [Bb, tq, D]   bf16, head h lives in columns [h*Dh : (h+1)*Dh]
    # k_ref:    [Bb, Nk, D]   bf16 (resident across the query-tile axis)
    # v_ref:    [Bb, Nk, D]   bf16
    # dmat_ref: [Bb, tq, Nk]  bf16   (or [Bb, Nk, tq] when dmat_transposed)
    # w1s_ref:  [MH, H*Nk]    mix_dtype  mix_W1[:, 0, :] with 1/sqrt(Dh) folded, lane-packed per head
    # w1d_ref:  [MH, H*Nk]    mix_dtype  mix_W1[:, 1, :] lane-packed
    # b1_ref:   [MH, H*Nk]    mix_dtype
    # w2_ref:   [MH, H*Nk]    mix_dtype  mix_W2[:, :, 0] lane-packed
    # o_ref:    [Bb, tq, D]   bf16 (heads merged along D, one lane-dense store per batch elem)
    # NOTE: mix_b2 is dropped on purpose: constant per (head,row) over keys -> cancels in softmax.
    Bb = q_ref.shape[0]
    H, Dh = num_heads, head_dim
    MH = w1s_ref.shape[0]
    Nk = k_ref.shape[1]

    def per_batch(b):
        qb = q_ref[b]                                   # [tq, D]  bf16
        kb = k_ref[b]                                   # [Nk, D]  bf16
        vb = v_ref[b]                                   # [Nk, D]  bf16

        # dmat tile; column pass transposes in-kernel (XLU slot, otherwise idle)
        dm = dmat_ref[b].astype(jnp.float32)
        if dmat_transposed:
            dm = dm.T                                   # [tq, Nk]
        dm = dm.astype(mix_dtype)

        # per-head raw scores (MXU), lane-packed across heads: [tq, H*Nk]
        score_parts = []
        for h in range(H):
            hs = h * Dh
            score_parts.append(
                lax.dot_general(qb[:, hs:hs + Dh], kb[:, hs:hs + Dh],
                                (((1,), (1,)), ((), ())),
                                preferred_element_type=jnp.float32))
        scores = jnp.concatenate(score_parts, axis=-1).astype(mix_dtype)   # [tq, H*Nk]
        dmp = jnp.concatenate([dm] * H, axis=-1)                           # [tq, H*Nk]

        # MatNet score mixer MLP (2 -> MH -> 1), lane-packed across heads.
        # Weight rows are lane-replicated VMEM reads -> no per-j scalar splats.
        acc = None
        for j in range(MH):
            hid = scores * w1s_ref[j, :] + dmp * w1d_ref[j, :] + b1_ref[j, :]
            term = jnp.maximum(hid, 0.0) * w2_ref[j, :]
            acc = term if acc is None else acc + term

        # softmax over keys per head segment; stats in f32.
        # Row-global max is an exact per-head shift (each segment subtracts a constant).
        mixed = acc.astype(jnp.float32)                                    # [tq, H*Nk]
        gmax = jnp.max(mixed, axis=-1, keepdims=True)
        e = jnp.exp(mixed - gmax)

        out_parts = []
        for h in range(H):
            seg = e[:, h * Nk:(h + 1) * Nk]                                # [tq, Nk] f32
            inv = pl.reciprocal(jnp.sum(seg, axis=-1, keepdims=True), approx=True)
            attn = (seg * inv).astype(vb.dtype)                            # bf16
            out_parts.append(jnp.dot(attn, vb[:, h * Dh:(h + 1) * Dh],
                                     preferred_element_type=jnp.float32))  # [tq, Dh]

        # single lane-dense [tq, D] store per batch element
        o_ref[b] = jnp.concatenate(out_parts, axis=-1).astype(o_ref.dtype)

    if Bb == 1:
        per_batch(0)                      # static index path
    else:
        pl.loop(0, Bb)(per_batch)         # bounded live ranges for packed batches


# ----------------------------------------------------------------------------- planning
def _step_bytes(bb, tq, Nk, D, H, mix_bytes):
    """Per-grid-step VMEM estimate, including Pallas double buffering."""
    q_b = bb * tq * D * 2                     # bf16
    kv_b = 2 * bb * Nk * D * 2                # bf16 k + v
    dm_b = bb * tq * Nk * 2                   # bf16
    o_b = bb * tq * D * 2                     # bf16
    tmp = bb * tq * H * Nk * (4 * mix_bytes + 8)   # packed mixer slabs + f32 mixed/e
    return 2 * (q_b + kv_b + dm_b) + 2 * o_b + tmp


def _plan(B, Mq, Nk, D, H, cap_bytes, mix_bytes):
    """Pick (batch pack, query tile, #query tiles) against a generation-aware budget."""
    budget = max(int(0.40 * cap_bytes), 4 << 20)

    # query tile: full M if it fits, else the largest 128-multiple that fits
    tq = Mq
    if _step_bytes(1, tq, Nk, D, H, mix_bytes) > budget:
        tq = 128
        while tq * 2 < Mq and _step_bytes(1, tq * 2, Nk, D, H, mix_bytes) <= budget:
            tq *= 2
        tq = min(tq, Mq)
    n_mt = pl.cdiv(Mq, tq)

    # batch packing only when there is a single query tile (amortize ~0.35us/step at
    # tiny M,N) while still targeting >= 4 grid steps when the batch allows it.
    bb = 1
    if n_mt == 1:
        target_steps = min(4, B)
        for cand in range(min(B, 16), 0, -1):
            if (B % cand == 0 and (B // cand) >= target_steps
                    and _step_bytes(cand, tq, Nk, D, H, mix_bytes) <= budget):
                bb = cand
                break
    return bb, tq, n_mt


# ----------------------------------------------------------------------------- wrapper
def mixed_cross_attention(q, k, v, dmat, mix_W1, mix_b1, mix_W2, num_heads,
                          *, dmat_transposed=False):
    """q: [B,Mq,D] bf16   k,v: [B,Nk,D] bf16
    dmat: [B,Mq,Nk] bf16 (or [B,Nk,Mq] when dmat_transposed)  ->  [B,Mq,D] bf16."""
    B, Mq, D = q.shape
    Nk = k.shape[1]
    H = num_heads
    Dh = D // H
    MH = mix_W1.shape[-1]

    kind = _device_kind()
    cap = _vmem_capacity_bytes(kind)
    # bf16 mixer only where the VPU has native bf16 (v6e / v7x); f32 elsewhere (v5*).
    mix_dtype = jnp.bfloat16 if ("v6" in kind or "v7" in kind or "7x" in kind) else jnp.float32
    mix_bytes = jnp.dtype(mix_dtype).itemsize

    # mixer weight tables, lane-packed per head: value for lane (h*Nk + i) is w[h, j]
    scale = 1.0 / math.sqrt(Dh)

    def pack(w):                                   # [H, MH] -> [MH, H*Nk]
        return jnp.repeat(w.T, Nk, axis=1).astype(mix_dtype)

    w1s_p = pack(mix_W1[:, 0, :] * scale)          # 1/sqrt(Dh) folded into w1s
    w1d_p = pack(mix_W1[:, 1, :])
    b1_p = pack(mix_b1)
    w2_p = pack(mix_W2[:, :, 0])
    # mix_b2 dropped: constant per (head, row) over the key axis -> cancels in softmax.

    bb, tq, n_mt = _plan(B, Mq, Nk, D, H, cap, mix_bytes)
    grid = (B // bb, n_mt)

    if dmat_transposed:
        dmat_spec = pl.BlockSpec((bb, Nk, tq), lambda i, j: (i, 0, j))
    else:
        dmat_spec = pl.BlockSpec((bb, tq, Nk), lambda i, j: (i, j, 0))
    wspec = pl.BlockSpec((MH, H * Nk), lambda i, j: (0, 0))

    tables = 4 * MH * H * Nk * mix_bytes
    step = _step_bytes(bb, tq, Nk, D, H, mix_bytes)
    vmem_limit = int(min(cap - (8 << 20),
                         max(step + tables + (4 << 20), 16 << 20)))

    kernel = functools.partial(_mixed_score_attention_kernel,
                               num_heads=H, head_dim=Dh,
                               mix_dtype=mix_dtype,
                               dmat_transposed=dmat_transposed)

    return pl.pallas_call(
        kernel,
        out_shape=jax.ShapeDtypeStruct((B, Mq, D), jnp.bfloat16),
        grid=grid,
        in_specs=[
            pl.BlockSpec((bb, tq, D), lambda i, j: (i, j, 0)),
            pl.BlockSpec((bb, Nk, D), lambda i, j: (i, 0, 0)),
            pl.BlockSpec((bb, Nk, D), lambda i, j: (i, 0, 0)),
            dmat_spec,
            wspec, wspec, wspec, wspec,
        ],
        out_specs=pl.BlockSpec((bb, tq, D), lambda i, j: (i, j, 0)),
        compiler_params=pltpu.CompilerParams(
            dimension_semantics=("parallel", "parallel"),
            vmem_limit_bytes=vmem_limit),
    )(q, k, v, dmat, w1s_p, w1d_p, b1_p, w2_p)


# ----------------------------------------------------------------------------- module glue
def matnet_cross_mha(q_input, kv_input, dmat_bf16, params, num_heads, *, dmat_transposed=False):
    """One MatNetCrossMHA block. q_input: [B,Mq,D], kv_input: [B,Nk,D]."""
    D = q_input.shape[-1]

    q = (q_input @ params["Wq"].T).astype(jnp.bfloat16)            # [B,Mq,D]
    kv = kv_input @ params["Wkv"].T                                # [B,Nk,2D] (two h d)
    k = kv[..., :D].astype(jnp.bfloat16)                           # [B,Nk,D]
    v = kv[..., D:].astype(jnp.bfloat16)                           # [B,Nk,D]

    heads = mixed_cross_attention(q, k, v, dmat_bf16,
                                  params["mix_W1"], params["mix_b1"], params["mix_W2"],
                                  num_heads, dmat_transposed=dmat_transposed)   # bf16
    return heads @ params["Wo"].T                                  # promoted to f32


def matnet_mha(row_emb, col_emb, dmat, row_params, col_params, num_heads, attn_mask=None):
    # TODO(synk): boolean attn_mask handling (data-dependent masked_fill / all-False
    # fix-up) and dropout are not implemented; only attn_mask=None is supported here.
    assert attn_mask is None
    dmat_bf16 = dmat.astype(jnp.bfloat16)          # cast once, shared by both passes
    upd_row = matnet_cross_mha(row_emb, col_emb, dmat_bf16, row_params, num_heads,
                               dmat_transposed=False)
    upd_col = matnet_cross_mha(col_emb, row_emb, dmat_bf16, col_params, num_heads,
                               dmat_transposed=True)               # in-kernel transpose
    return upd_row, upd_col


# ----------------------------------------------------------------------------- params
def init_cross_mha_params(key, embed_dim, num_heads, mixer_hidden_dim=16,
                          mix1_init=(1 / 2) ** 0.5, mix2_init=(1 / 16) ** 0.5):
    ks = jax.random.split(key, 7)
    lin = 1.0 / math.sqrt(embed_dim)
    u = lambda k, shape, b: jax.random.uniform(k, shape, jnp.float32, minval=-b, maxval=b)
    return {
        "Wq":  u(ks[0], (embed_dim, embed_dim), lin),
        "Wkv": u(ks[1], (2 * embed_dim, embed_dim), lin),
        "Wo":  u(ks[2], (embed_dim, embed_dim), lin),
        "mix_W1": u(ks[3], (num_heads, 2, mixer_hidden_dim), mix1_init),
        "mix_b1": u(ks[4], (num_heads, mixer_hidden_dim), mix1_init),
        "mix_W2": u(ks[5], (num_heads, mixer_hidden_dim, 1), mix2_init),
        "mix_b2": u(ks[6], (num_heads, 1), mix2_init),
    }


# ----------------------------------------------------------------------------- pure-JAX reference
def _reference_cross_mha(q_input, kv_input, dmat, p, num_heads):
    B, M, D = q_input.shape
    N = kv_input.shape[1]
    H = num_heads
    Dh = D // H
    q = (q_input @ p["Wq"].T).reshape(B, M, H, Dh).transpose(0, 2, 1, 3)
    kv = (kv_input @ p["Wkv"].T).reshape(B, N, 2, H, Dh)
    k = kv[:, :, 0].transpose(0, 2, 1, 3)
    v = kv[:, :, 1].transpose(0, 2, 1, 3)
    scores = jnp.einsum("bhmd,bhnd->bhmn", q, k) / math.sqrt(Dh)
    dmat_e = jnp.broadcast_to(dmat[:, None, :, :, None], (B, H, M, N, 1))
    mix = jnp.concatenate([scores[..., None], dmat_e], axis=-1)            # [B,H,M,N,2]
    hidden = jax.nn.relu(jnp.einsum("bhmnf,hfj->bhmnj", mix, p["mix_W1"])
                         + p["mix_b1"][None, :, None, None, :])
    mixed = (jnp.einsum("bhmnj,hj->bhmn", hidden, p["mix_W2"][..., 0])
             + p["mix_b2"][:, 0][None, :, None, None])
    attn = jax.nn.softmax(mixed, axis=-1)
    out = jnp.einsum("bhmn,bhnd->bhmd", attn, v)
    return out.transpose(0, 2, 1, 3).reshape(B, M, D) @ p["Wo"].T


def _reference_matnet_mha(row_emb, col_emb, dmat, rp, cp, num_heads):
    return (_reference_cross_mha(row_emb, col_emb, dmat, rp, num_heads),
            _reference_cross_mha(col_emb, row_emb, jnp.swapaxes(dmat, -2, -1), cp, num_heads))


# ----------------------------------------------------------------------------- main
if __name__ == "__main__":
    B, M, N, D, H = 2, 8, 8, 32, 4     # batch, rows, cols, embed_dim, num_heads

    key = jax.random.PRNGKey(0)
    k_row, k_col, k_dmat, k_p1, k_p2 = jax.random.split(key, 5)
    row_emb = jax.random.normal(k_row, (B, M, D), jnp.float32)
    col_emb = jax.random.normal(k_col, (B, N, D), jnp.float32)
    dmat = jax.random.normal(k_dmat, (B, M, N), jnp.float32)

    row_params = init_cross_mha_params(k_p1, D, H)
    col_params = init_cross_mha_params(k_p2, D, H)

    upd_row, upd_col = matnet_mha(row_emb, col_emb, dmat, row_params, col_params, H)
    jax.block_until_ready((upd_row, upd_col))

    ref_row, ref_col = _reference_matnet_mha(row_emb, col_emb, dmat,
                                             row_params, col_params, H)
    assert upd_row.shape == (B, M, D) and upd_col.shape == (B, N, D)
    assert jnp.allclose(upd_row, ref_row, atol=6e-2, rtol=6e-2)
    assert jnp.allclose(upd_col, ref_col, atol=6e-2, rtol=6e-2)

    print("KERNEL_OK")
</pallas_src>

<mosaic_0001>
module attributes {stable_mosaic.version = 11 : i64} {
  func.func @_mixed_score_attention_kernel(%arg0: i32, %arg1: i32, %arg2: memref<1x8x32xbf16, #tpu.memory_space<vmem>>, %arg3: memref<1x8x32xbf16, #tpu.memory_space<vmem>>, %arg4: memref<1x8x32xbf16, #tpu.memory_space<vmem>>, %arg5: memref<1x8x8xbf16, #tpu.memory_space<vmem>>, %arg6: memref<16x32xf32, #tpu.memory_space<vmem>>, %arg7: memref<16x32xf32, #tpu.memory_space<vmem>>, %arg8: memref<16x32xf32, #tpu.memory_space<vmem>>, %arg9: memref<16x32xf32, #tpu.memory_space<vmem>>, %arg10: memref<1x8x32xbf16, #tpu.memory_space<vmem>>) attributes {dimension_semantics = [#tpu.dimension_semantics<parallel>, #tpu.dimension_semantics<parallel>], iteration_bounds = array<i64: 2, 1>, scalar_prefetch = 0 : i64, scratch_operands = 0 : i64, tpu.core_type = #tpu.core_type<tc>, window_params = [{transform_indices = @transform_0, window_bounds = array<i64: 1, 8, 32>}, {transform_indices = @transform_1, window_bounds = array<i64: 1, 8, 32>}, {transform_indices = @transform_2, window_bounds = array<i64: 1, 8, 32>}, {transform_indices = @transform_3, window_bounds = array<i64: 1, 8, 8>}, {pipeline_mode = #tpu.pipeline_mode<synchronous>, transform_indices = @transform_4, window_bounds = array<i64: 16, 32>}, {pipeline_mode = #tpu.pipeline_mode<synchronous>, transform_indices = @transform_5, window_bounds = array<i64: 16, 32>}, {pipeline_mode = #tpu.pipeline_mode<synchronous>, transform_indices = @transform_6, window_bounds = array<i64: 16, 32>}, {pipeline_mode = #tpu.pipeline_mode<synchronous>, transform_indices = @transform_7, window_bounds = array<i64: 16, 32>}, {transform_indices = @transform_8, window_bounds = array<i64: 1, 8, 32>}]} {
    %c0 = arith.constant 0 : index
    %c0_0 = arith.constant 0 : index
    %c0_1 = arith.constant 0 : index
    %0 = vector.load %arg2[%c0, %c0_0, %c0_1] : memref<1x8x32xbf16, #tpu.memory_space<vmem>>, vector<1x8x32xbf16>
    %1 = vector.shape_cast %0 : vector<1x8x32xbf16> to vector<8x32xbf16>
    %c0_2 = arith.constant 0 : index
    %c0_3 = arith.constant 0 : index
    %c0_4 = arith.constant 0 : index
    %2 = vector.load %arg3[%c0_2, %c0_3, %c0_4] : memref<1x8x32xbf16, #tpu.memory_space<vmem>>, vector<1x8x32xbf16>
    %3 = vector.shape_cast %2 : vector<1x8x32xbf16> to vector<8x32xbf16>
    %c0_5 = arith.constant 0 : index
    %c0_6 = arith.constant 0 : index
    %c0_7 = arith.constant 0 : index
    %4 = vector.load %arg4[%c0_5, %c0_6, %c0_7] : memref<1x8x32xbf16, #tpu.memory_space<vmem>>, vector<1x8x32xbf16>
    %5 = vector.shape_cast %4 : vector<1x8x32xbf16> to vector<8x32xbf16>
    %c0_8 = arith.constant 0 : index
    %c0_9 = arith.constant 0 : index
    %c0_10 = arith.constant 0 : index
    %6 = vector.load %arg5[%c0_8, %c0_9, %c0_10] : memref<1x8x8xbf16, #tpu.memory_space<vmem>>, vector<1x8x8xbf16>
    %7 = vector.shape_cast %6 : vector<1x8x8xbf16> to vector<8x8xbf16>
    %8 = arith.extf %7 : vector<8x8xbf16> to vector<8x8xf32>
    %9 = vector.extract_strided_slice %1 {offsets = [0, 0], sizes = [8, 8], strides = [1, 1]} : vector<8x32xbf16> to vector<8x8xbf16>
    %10 = vector.extract_strided_slice %3 {offsets = [0, 0], sizes = [8, 8], strides = [1, 1]} : vector<8x32xbf16> to vector<8x8xbf16>
    %cst = arith.constant dense<0.000000e+00> : vector<8x8xf32>
    %11 = tpu.matmul %9, %10, %cst {dimension_numbers = #tpu.dot_dimension_numbers<[1], [1], [0], [0], [0, 0, 1, 0], [], []>} : vector<8x8xbf16>, vector<8x8xbf16>, vector<8x8xf32> -> vector<8x8xf32>
    %12 = vector.extract_strided_slice %1 {offsets = [0, 8], sizes = [8, 8], strides = [1, 1]} : vector<8x32xbf16> to vector<8x8xbf16>
    %13 = vector.extract_strided_slice %3 {offsets = [0, 8], sizes = [8, 8], strides = [1, 1]} : vector<8x32xbf16> to vector<8x8xbf16>
    %cst_11 = arith.constant dense<0.000000e+00> : vector<8x8xf32>
    %14 = tpu.matmul %12, %13, %cst_11 {dimension_numbers = #tpu.dot_dimension_numbers<[1], [1], [0], [0], [0, 0, 1, 0], [], []>} : vector<8x8xbf16>, vector<8x8xbf16>, vector<8x8xf32> -> vector<8x8xf32>
    %15 = vector.extract_strided_slice %1 {offsets = [0, 16], sizes = [8, 8], strides = [1, 1]} : vector<8x32xbf16> to vector<8x8xbf16>
    %16 = vector.extract_strided_slice %3 {offsets = [0, 16], sizes = [8, 8], strides = [1, 1]} : vector<8x32xbf16> to vector<8x8xbf16>
    %cst_12 = arith.constant dense<0.000000e+00> : vector<8x8xf32>
    %17 = tpu.matmul %15, %16, %cst_12 {dimension_numbers = #tpu.dot_dimension_numbers<[1], [1], [0], [0], [0, 0, 1, 0], [], []>} : vector<8x8xbf16>, vector<8x8xbf16>, vector<8x8xf32> -> vector<8x8xf32>
    %18 = vector.extract_strided_slice %1 {offsets = [0, 24], sizes = [8, 8], strides = [1, 1]} : vector<8x32xbf16> to vector<8x8xbf16>
    %19 = vector.extract_strided_slice %3 {offsets = [0, 24], sizes = [8, 8], strides = [1, 1]} : vector<8x32xbf16> to vector<8x8xbf16>
    %cst_13 = arith.constant dense<0.000000e+00> : vector<8x8xf32>
    %20 = tpu.matmul %18, %19, %cst_13 {dimension_numbers = #tpu.dot_dimension_numbers<[1], [1], [0], [0], [0, 0, 1, 0], [], []>} : vector<8x8xbf16>, vector<8x8xbf16>, vector<8x8xf32> -> vector<8x8xf32>
    %21 = tpu.concatenate %11, %14, %17, %20 in 1 : vector<8x8xf32>, vector<8x8xf32>, vector<8x8xf32>, vector<8x8xf32> -> vector<8x32xf32>
    %22 = tpu.concatenate %8, %8, %8, %8 in 1 : vector<8x8xf32>, vector<8x8xf32>, vector<8x8xf32>, vector<8x8xf32> -> vector<8x32xf32>
    %c0_14 = arith.constant 0 : index
    %c0_15 = arith.constant 0 : index
    %23 = vector.load %arg6[%c0_14, %c0_15] : memref<16x32xf32, #tpu.memory_space<vmem>>, vector<1x32xf32>
    %24 = vector.shape_cast %23 : vector<1x32xf32> to vector<32xf32>
    %25 = vector.shape_cast %24 : vector<32xf32> to vector<1x32xf32>
    %26 = vector.broadcast %25 : vector<1x32xf32> to vector<8x32xf32>
    %27 = arith.mulf %21, %26 : vector<8x32xf32>
    %c0_16 = arith.constant 0 : index
    %c0_17 = arith.constant 0 : index
    %28 = vector.load %arg7[%c0_16, %c0_17] : memref<16x32xf32, #tpu.memory_space<vmem>>, vector<1x32xf32>
    %29 = vector.shape_cast %28 : vector<1x32xf32> to vector<32xf32>
    %30 = vector.shape_cast %29 : vector<32xf32> to vector<1x32xf32>
    %31 = vector.broadcast %30 : vector<1x32xf32> to vector<8x32xf32>
    %32 = arith.mulf %22, %31 : vector<8x32xf32>
    %33 = arith.addf %27, %32 : vector<8x32xf32>
    %c0_18 = arith.constant 0 : index
    %c0_19 = arith.constant 0 : index
    %34 = vector.load %arg8[%c0_18, %c0_19] : memref<16x32xf32, #tpu.memory_space<vmem>>, vector<1x32xf32>
    %35 = vector.shape_cast %34 : vector<1x32xf32> to vector<32xf32>
    %36 = vector.shape_cast %35 : vector<32xf32> to vector<1x32xf32>
    %37 = vector.broadcast %36 : vector<1x32xf32> to vector<8x32xf32>
    %38 = arith.addf %33, %37 : vector<8x32xf32>
    %cst_20 = arith.constant 0.000000e+00 : f32
    %39 = vector.broadcast %cst_20 : f32 to vector<8x32xf32>
    %40 = arith.maximumf %38, %39 : vector<8x32xf32>
    %c0_21 = arith.constant 0 : index
    %c0_22 = arith.constant 0 : index
    %41 = vector.load %arg9[%c0_21, %c0_22] : memref<16x32xf32, #tpu.memory_space<vmem>>, vector<1x32xf32>
    %42 = vector.shape_cast %41 : vector<1x32xf32> to vector<32xf32>
    %43 = vector.shape_cast %42 : vector<32xf32> to vector<1x32xf32>
    %44 = vector.broadcast %43 : vector<1x32xf32> to vector<8x32xf32>
    %45 = arith.mulf %40, %44 : vector<8x32xf32>
    %c1 = arith.constant 1 : index
    %c0_23 = arith.constant 0 : index
    %46 = vector.load %arg6[%c1, %c0_23] : memref<16x32xf32, #tpu.memory_space<vmem>>, vector<1x32xf32>
    %47 = vector.shape_cast %46 : vector<1x32xf32> to vector<32xf32>
    %48 = vector.shape_cast %47 : vector<32xf32> to vector<1x32xf32>
    %49 = vector.broadcast %48 : vector<1x32xf32> to vector<8x32xf32>
    %50 = arith.mulf %21, %49 : vector<8x32xf32>
    %c1_24 = arith.constant 1 : index
    %c0_25 = arith.constant 0 : index
    %51 = vector.load %arg7[%c1_24, %c0_25] : memref<16x32xf32, #tpu.memory_space<vmem>>, vector<1x32xf32>
    %52 = vector.shape_cast %51 : vector<1x32xf32> to vector<32xf32>
    %53 = vector.shape_cast %52 : vector<32xf32> to vector<1x32xf32>
    %54 = vector.broadcast %53 : vector<1x32xf32> to vector<8x32xf32>
    %55 = arith.mulf %22, %54 : vector<8x32xf32>
    %56 = arith.addf %50, %55 : vector<8x32xf32>
    %c1_26 = arith.constant 1 : index
    %c0_27 = arith.constant 0 : index
    %57 = vector.load %arg8[%c1_26, %c0_27] : memref<16x32xf32, #tpu.memory_space<vmem>>, vector<1x32xf32>
    %58 = vector.shape_cast %57 : vector<1x32xf32> to vector<32xf32>
    %59 = vector.shape_cast %58 : vector<32xf32> to vector<1x32xf32>
    %60 = vector.broadcast %59 : vector<1x32xf32> to vector<8x32xf32>
    %61 = arith.addf %56, %60 : vector<8x32xf32>
    %cst_28 = arith.constant 0.000000e+00 : f32
    %62 = vector.broadcast %cst_28 : f32 to vector<8x32xf32>
    %63 = arith.maximumf %61, %62 : vector<8x32xf32>
    %c1_29 = arith.constant 1 : index
    %c0_30 = arith.constant 0 : index
    %64 = vector.load %arg9[%c1_29, %c0_30] : memref<16x32xf32, #tpu.memory_space<vmem>>, vector<1x32xf32>
    %65 = vector.shape_cast %64 : vector<1x32xf32> to vector<32xf32>
    %66 = vector.shape_cast %65 : vector<32xf32> to vector<1x32xf32>
    %67 = vector.broadcast %66 : vector<1x32xf32> to vector<8x32xf32>
    %68 = arith.mulf %63, %67 : vector<8x32xf32>
    %69 = arith.addf %45, %68 : vector<8x32xf32>
    %c2 = arith.constant 2 : index
    %c0_31 = arith.constant 0 : index
    %70 = vector.load %arg6[%c2, %c0_31] : memref<16x32xf32, #tpu.memory_space<vmem>>, vector<1x32xf32>
    %71 = vector.shape_cast %70 : vector<1x32xf32> to vector<32xf32>
    %72 = vector.shape_cast %71 : vector<32xf32> to vector<1x32xf32>
    %73 = vector.broadcast %72 : vector<1x32xf32> to vector<8x32xf32>
    %74 = arith.mulf %21, %73 : vector<8x32xf32>
    %c2_32 = arith.constant 2 : index
    %c0_33 = arith.constant 0 : index
    %75 = vector.load %arg7[%c2_32, %c0_33] : memref<16x32xf32, #tpu.memory_space<vmem>>, vector<1x32xf32>
    %76 = vector.shape_cast %75 : vector<1x32xf32> to vector<32xf32>
    %77 = vector.shape_cast %76 : vector<32xf32> to vector<1x32xf32>
    %78 = vector.broadcast %77 : vector<1x32xf32> to vector<8x32xf32>
    %79 = arith.mulf %22, %78 : vector<8x32xf32>
    %80 = arith.addf %74, %79 : vector<8x32xf32>
    %c2_34 = arith.constant 2 : index
    %c0_35 = arith.constant 0 : index
    %81 = vector.load %arg8[%c2_34, %c0_35] : memref<16x32xf32, #tpu.memory_space<vmem>>, vector<1x32xf32>
    %82 = vector.shape_cast %81 : vector<1x32xf32> to vector<32xf32>
    %83 = vector.shape_cast %82 : vector<32xf32> to vector<1x32xf32>
    %84 = vector.broadcast %83 : vector<1x32xf32> to vector<8x32xf32>
    %85 = arith.addf %80, %84 : vector<8x32xf32>
    %cst_36 = arith.constant 0.000000e+00 : f32
    %86 = vector.broadcast %cst_36 : f32 to vector<8x32xf32>
    %87 = arith.maximumf %85, %86 : vector<8x32xf32>
    %c2_37 = arith.constant 2 : index
    %c0_38 = arith.constant 0 : index
    %88 = vector.load %arg9[%c2_37, %c0_38] : memref<16x32xf32, #tpu.memory_space<vmem>>, vector<1x32xf32>
    %89 = vector.shape_cast %88 : vector<1x32xf32> to vector<32xf32>
    %90 = vector.shape_cast %89 : vector<32xf32> to vector<1x32xf32>
    %91 = vector.broadcast %90 : vector<1x32xf32> to vector<8x32xf32>
    %92 = arith.mulf %87, %91 : vector<8x32xf32>
    %93 = arith.addf %69, %92 : vector<8x32xf32>
    %c3 = arith.constant 3 : index
    %c0_39 = arith.constant 0 : index
    %94 = vector.load %arg6[%c3, %c0_39] : memref<16x32xf32, #tpu.memory_space<vmem>>, vector<1x32xf32>
    %95 = vector.shape_cast %94 : vector<1x32xf32> to vector<32xf32>
    %96 = vector.shape_cast %95 : vector<32xf32> to vector<1x32xf32>
    %97 = vector.broadcast %96 : vector<1x32xf32> to vector<8x32xf32>
    %98 = arith.mulf %21, %97 : vector<8x32xf32>
    %c3_40 = arith.constant 3 : index
    %c0_41 = arith.constant 0 : index
    %99 = vector.load %arg7[%c3_40, %c0_41] : memref<16x32xf32, #tpu.memory_space<vmem>>, vector<1x32xf32>
    %100 = vector.shape_cast %99 : vector<1x32xf32> to vector<32xf32>
    %101 = vector.shape_cast %100 : vector<32xf32> to vector<1x32xf32>
    %102 = vector.broadcast %101 : vector<1x32xf32> to vector<8x32xf32>
    %103 = arith.mulf %22, %102 : vector<8x32xf32>
    %104 = arith.addf %98, %103 : vector<8x32xf32>
    %c3_42 = arith.constant 3 : index
    %c0_43 = arith.constant 0 : index
    %105 = vector.load %arg8[%c3_42, %c0_43] : memref<16x32xf32, #tpu.memory_space<vmem>>, vector<1x32xf32>
    %106 = vector.shape_cast %105 : vector<1x32xf32> to vector<32xf32>
    %107 = vector.shape_cast %106 : vector<32xf32> to vector<1x32xf32>
    %108 = vector.broadcast %107 : vector<1x32xf32> to vector<8x32xf32>
    %109 = arith.addf %104, %108 : vector<8x32xf32>
    %cst_44 = arith.constant 0.000000e+00 : f32
    %110 = vector.broadcast %cst_44 : f32 to vector<8x32xf32>
    %111 = arith.maximumf %109, %110 : vector<8x32xf32>
    %c3_45 = arith.constant 3 : index
    %c0_46 = arith.constant 0 : index
    %112 = vector.load %arg9[%c3_45, %c0_46] : memref<16x32xf32, #tpu.memory_space<vmem>>, vector<1x32xf32>
    %113 = vector.shape_cast %112 : vector<1x32xf32> to vector<32xf32>
    %114 = vector.shape_cast %113 : vector<32xf32> to vector<1x32xf32>
    %115 = vector.broadcast %114 : vector<1x32xf32> to vector<8x32xf32>
    %116 = arith.mulf %111, %115 : vector<8x32xf32>
    %117 = arith.addf %93, %116 : vector<8x32xf32>
    %c4 = arith.constant 4 : index
    %c0_47 = arith.constant 0 : index
    %118 = vector.load %arg6[%c4, %c0_47] : memref<16x32xf32, #tpu.memory_space<vmem>>, vector<1x32xf32>
    %119 = vector.shape_cast %118 : vector<1x32xf32> to vector<32xf32>
    %120 = vector.shape_cast %119 : vector<32xf32> to vector<1x32xf32>
    %121 = vector.broadcast %120 : vector<1x32xf32> to vector<8x32xf32>
    %122 = arith.mulf %21, %121 : vector<8x32xf32>
    %c4_48 = arith.constant 4 : index
    %c0_49 = arith.constant 0 : index
    %123 = vector.load %arg7[%c4_48, %c0_49] : memref<16x32xf32, #tpu.memory_space<vmem>>, vector<1x32xf32>
    %124 = vector.shape_cast %123 : vector<1x32xf32> to vector<32xf32>
    %125 = vector.shape_cast %124 : vector<32xf32> to vector<1x32xf32>
    %126 = vector.broadcast %125 : vector<1x32xf32> to vector<8x32xf32>
    %127 = arith.mulf %22, %126 : vector<8x32xf32>
    %128 = arith.addf %122, %127 : vector<8x32xf32>
    %c4_50 = arith.constant 4 : index
    %c0_51 = arith.constant 0 : index
    %129 = vector.load %arg8[%c4_50, %c0_51] : memref<16x32xf32, #tpu.memory_space<vmem>>, vector<1x32xf32>
    %130 = vector.shape_cast %129 : vector<1x32xf32> to vector<32xf32>
    %131 = vector.shape_cast %130 : vector<32xf32> to vector<1x32xf32>
    %132 = vector.broadcast %131 : vector<1x32xf32> to vector<8x32xf32>
    %133 = arith.addf %128, %132 : vector<8x32xf32>
    %cst_52 = arith.constant 0.000000e+00 : f32
    %134 = vector.broadcast %cst_52 : f32 to vector<8x32xf32>
    %135 = arith.maximumf %133, %134 : vector<8x32xf32>
    %c4_53 = arith.constant 4 : index
    %c0_54 = arith.constant 0 : index
    %136 = vector.load %arg9[%c4_53, %c0_54] : memref<16x32xf32, #tpu.memory_space<vmem>>, vector<1x32xf32>
    %137 = vector.shape_cast %136 : vector<1x32xf32> to vector<32xf32>
    %138 = vector.shape_cast %137 : vector<32xf32> to vector<1x32xf32>
    %139 = vector.broadcast %138 : vector<1x32xf32> to vector<8x32xf32>
    %140 = arith.mulf %135, %139 : vector<8x32xf32>
    %141 = arith.addf %117, %140 : vector<8x32xf32>
    %c5 = arith.constant 5 : index
    %c0_55 = arith.constant 0 : index
    %142 = vector.load %arg6[%c5, %c0_55] : memref<16x32xf32, #tpu.memory_space<vmem>>, vector<1x32xf32>
    %143 = vector.shape_cast %142 : vector<1x32xf32> to vector<32xf32>
    %144 = vector.shape_cast %143 : vector<32xf32> to vector<1x32xf32>
    %145 = vector.broadcast %144 : vector<1x32xf32> to vector<8x32xf32>
    %146 = arith.mulf %21, %145 : vector<8x32xf32>
    %c5_56 = arith.constant 5 : index
    %c0_57 = arith.constant 0 : index
    %147 = vector.load %arg7[%c5_56, %c0_57] : memref<16x32xf32, #tpu.memory_space<vmem>>, vector<1x32xf32>
    %148 = vector.shape_cast %147 : vector<1x32xf32> to vector<32xf32>
    %149 = vector.shape_cast %148 : vector<32xf32> to vector<1x32xf32>
    %150 = vector.broadcast %149 : vector<1x32xf32> to vector<8x32xf32>
    %151 = arith.mulf %22, %150 : vector<8x32xf32>
    %152 = arith.addf %146, %151 : vector<8x32xf32>
    %c5_58 = arith.constant 5 : index
    %c0_59 = arith.constant 0 : index
    %153 = vector.load %arg8[%c5_58, %c0_59] : memref<16x32xf32, #tpu.memory_space<vmem>>, vector<1x32xf32>
    %154 = vector.shape_cast %153 : vector<1x32xf32> to vector<32xf32>
    %155 = vector.shape_cast %154 : vector<32xf32> to vector<1x32xf32>
    %156 = vector.broadcast %155 : vector<1x32xf32> to vector<8x32xf32>
    %157 = arith.addf %152, %156 : vector<8x32xf32>
    %cst_60 = arith.constant 0.000000e+00 : f32
    %158 = vector.broadcast %cst_60 : f32 to vector<8x32xf32>
    %159 = arith.maximumf %157, %158 : vector<8x32xf32>
    %c5_61 = arith.constant 5 : index
    %c0_62 = arith.constant 0 : index
    %160 = vector.load %arg9[%c5_61, %c0_62] : memref<16x32xf32, #tpu.memory_space<vmem>>, vector<1x32xf32>
    %161 = vector.shape_cast %160 : vector<1x32xf32> to vector<32xf32>
    %162 = vector.shape_cast %161 : vector<32xf32> to vector<1x32xf32>
    %163 = vector.broadcast %162 : vector<1x32xf32> to vector<8x32xf32>
    %164 = arith.mulf %159, %163 : vector<8x32xf32>
    %165 = arith.addf %141, %164 : vector<8x32xf32>
    %c6 = arith.constant 6 : index
    %c0_63 = arith.constant 0 : index
    %166 = vector.load %arg6[%c6, %c0_63] : memref<16x32xf32, #tpu.memory_space<vmem>>, vector<1x32xf32>
    %167 = vector.shape_cast %166 : vector<1x32xf32> to vector<32xf32>
    %168 = vector.shape_cast %167 : vector<32xf32> to vector<1x32xf32>
    %169 = vector.broadcast %168 : vector<1x32xf32> to vector<8x32xf32>
    %170 = arith.mulf %21, %169 : vector<8x32xf32>
    %c6_64 = arith.constant 6 : index
    %c0_65 = arith.constant 0 : index
    %171 = vector.load %arg7[%c6_64, %c0_65] : memref<16x32xf32, #tpu.memory_space<vmem>>, vector<1x32xf32>
    %172 = vector.shape_cast %171 : vector<1x32xf32> to vector<32xf32>
    %173 = vector.shape_cast %172 : vector<32xf32> to vector<1x32xf32>
    %174 = vector.broadcast %173 : vector<1x32xf32> to vector<8x32xf32>
    %175 = arith.mulf %22, %174 : vector<8x32xf32>
    %176 = arith.addf %170, %175 : vector<8x32xf32>
    %c6_66 = arith.constant 6 : index
    %c0_67 = arith.constant 0 : index
    %177 = vector.load %arg8[%c6_66, %c0_67] : memref<16x32xf32, #tpu.memory_space<vmem>>, vector<1x32xf32>
    %178 = vector.shape_cast %177 : vector<1x32xf32> to vector<32xf32>
    %179 = vector.shape_cast %178 : vector<32xf32> to vector<1x32xf32>
    %180 = vector.broadcast %179 : vector<1x32xf32> to vector<8x32xf32>
    %181 = arith.addf %176, %180 : vector<8x32xf32>
    %cst_68 = arith.constant 0.000000e+00 : f32
    %182 = vector.broadcast %cst_68 : f32 to vector<8x32xf32>
    %183 = arith.maximumf %181, %182 : vector<8x32xf32>
    %c6_69 = arith.constant 6 : index
    %c0_70 = arith.constant 0 : index
    %184 = vector.load %arg9[%c6_69, %c0_70] : memref<16x32xf32, #tpu.memory_space<vmem>>, vector<1x32xf32>
    %185 = vector.shape_cast %184 : vector<1x32xf32> to vector<32xf32>
    %186 = vector.shape_cast %185 : vector<32xf32> to vector<1x32xf32>
    %187 = vector.broadcast %186 : vector<1x32xf32> to vector<8x32xf32>
    %188 = arith.mulf %183, %187 : vector<8x32xf32>
    %189 = arith.addf %165, %188 : vector<8x32xf32>
    %c7 = arith.constant 7 : index
    %c0_71 = arith.constant 0 : index
    %190 = vector.load %arg6[%c7, %c0_71] : memref<16x32xf32, #tpu.memory_space<vmem>>, vector<1x32xf32>
    %191 = vector.shape_cast %190 : vector<1x32xf32> to vector<32xf32>
    %192 = vector.shape_cast %191 : vector<32xf32> to vector<1x32xf32>
    %193 = vector.broadcast %192 : vector<1x32xf32> to vector<8x32xf32>
    %194 = arith.mulf %21, %193 : vector<8x32xf32>
    %c7_72 = arith.constant 7 : index
    %c0_73 = arith.constant 0 : index
    %195 = vector.load %arg7[%c7_72, %c0_73] : memref<16x32xf32, #tpu.memory_space<vmem>>, vector<1x32xf32>
    %196 = vector.shape_cast %195 : vector<1x32xf32> to vector<32xf32>
    %197 = vector.shape_cast %196 : vector<32xf32> to vector<1x32xf32>
    %198 = vector.broadcast %197 : vector<1x32xf32> to vector<8x32xf32>
    %199 = arith.mulf %22, %198 : vector<8x32xf32>
    %200 = arith.addf %194, %199 : vector<8x32xf32>
    %c7_74 = arith.constant 7 : index
    %c0_75 = arith.constant 0 : index
    %201 = vector.load %arg8[%c7_74, %c0_75] : memref<16x32xf32, #tpu.memory_space<vmem>>, vector<1x32xf32>
    %202 = vector.shape_cast %201 : vector<1x32xf32> to vector<32xf32>
    %203 = vector.shape_cast %202 : vector<32xf32> to vector<1x32xf32>
    %204 = vector.broadcast %203 : vector<1x32xf32> to vector<8x32xf32>
    %205 = arith.addf %200, %204 : vector<8x32xf32>
    %cst_76 = arith.constant 0.000000e+00 : f32
    %206 = vector.broadcast %cst_76 : f32 to vector<8x32xf32>
    %207 = arith.maximumf %205, %206 : vector<8x32xf32>
    %c7_77 = arith.constant 7 : index
    %c0_78 = arith.constant 0 : index
    %208 = vector.load %arg9[%c7_77, %c0_78] : memref<16x32xf32, #tpu.memory_space<vmem>>, vector<1x32xf32>
    %209 = vector.shape_cast %208 : vector<1x32xf32> to vector<32xf32>
    %210 = vector.shape_cast %209 : vector<32xf32> to vector<1x32xf32>
    %211 = vector.broadcast %210 : vector<1x32xf32> to vector<8x32xf32>
    %212 = arith.mulf %207, %211 : vector<8x32xf32>
    %213 = arith.addf %189, %212 : vector<8x32xf32>
    %c8 = arith.constant 8 : index
    %c0_79 = arith.constant 0 : index
    %214 = vector.load %arg6[%c8, %c0_79] : memref<16x32xf32, #tpu.memory_space<vmem>>, vector<1x32xf32>
    %215 = vector.shape_cast %214 : vector<1x32xf32> to vector<32xf32>
    %216 = vector.shape_cast %215 : vector<32xf32> to vector<1x32xf32>
    %217 = vector.broadcast %216 : vector<1x32xf32> to vector<8x32xf32>
    %218 = arith.mulf %21, %217 : vector<8x32xf32>
    %c8_80 = arith.constant 8 : index
    %c0_81 = arith.constant 0 : index
    %219 = vector.load %arg7[%c8_80, %c0_81] : memref<16x32xf32, #tpu.memory_space<vmem>>, vector<1x32xf32>
    %220 = vector.shape_cast %219 : vector<1x32xf32> to vector<32xf32>
    %221 = vector.shape_cast %220 : vector<32xf32> to vector<1x32xf32>
    %222 = vector.broadcast %221 : vector<1x32xf32> to vector<8x32xf32>
    %223 = arith.mulf %22, %222 : vector<8x32xf32>
    %224 = arith.addf %218, %223 : vector<8x32xf32>
    %c8_82 = arith.constant 8 : index
    %c0_83 = arith.constant 0 : index
    %225 = vector.load %arg8[%c8_82, %c0_83] : memref<16x32xf32, #tpu.memory_space<vmem>>, vector<1x32xf32>
    %226 = vector.shape_cast %225 : vector<1x32xf32> to vector<32xf32>
    %227 = vector.shape_cast %226 : vector<32xf32> to vector<1x32xf32>
    %228 = vector.broadcast %227 : vector<1x32xf32> to vector<8x32xf32>
    %229 = arith.addf %224, %228 : vector<8x32xf32>
    %cst_84 = arith.constant 0.000000e+00 : f32
    %230 = vector.broadcast %cst_84 : f32 to vector<8x32xf32>
    %231 = arith.maximumf %229, %230 : vector<8x32xf32>
    %c8_85 = arith.constant 8 : index
    %c0_86 = arith.constant 0 : index
    %232 = vector.load %arg9[%c8_85, %c0_86] : memref<16x32xf32, #tpu.memory_space<vmem>>, vector<1x32xf32>
    %233 = vector.shape_cast %232 : vector<1x32xf32> to vector<32xf32>
    %234 = vector.shape_cast %233 : vector<32xf32> to vector<1x32xf32>
    %235 = vector.broadcast %234 : vector<1x32xf32> to vector<8x32xf32>
    %236 = arith.mulf %231, %235 : vector<8x32xf32>
    %237 = arith.addf %213, %236 : vector<8x32xf32>
    %c9 = arith.constant 9 : index
    %c0_87 = arith.constant 0 : index
    %238 = vector.load %arg6[%c9, %c0_87] : memref<16x32xf32, #tpu.memory_space<vmem>>, vector<1x32xf32>
    %239 = vector.shape_cast %238 : vector<1x32xf32> to vector<32xf32>
    %240 = vector.shape_cast %239 : vector<32xf32> to vector<1x32xf32>
    %241 = vector.broadcast %240 : vector<1x32xf32> to vector<8x32xf32>
    %242 = arith.mulf %21, %241 : vector<8x32xf32>
    %c9_88 = arith.constant 9 : index
    %c0_89 = arith.constant 0 : index
    %243 = vector.load %arg7[%c9_88, %c0_89] : memref<16x32xf32, #tpu.memory_space<vmem>>, vector<1x32xf32>
    %244 = vector.shape_cast %243 : vector<1x32xf32> to vector<32xf32>
    %245 = vector.shape_cast %244 : vector<32xf32> to vector<1x32xf32>
    %246 = vector.broadcast %245 : vector<1x32xf32> to vector<8x32xf32>
    %247 = arith.mulf %22, %246 : vector<8x32xf32>
    %248 = arith.addf %242, %247 : vector<8x32xf32>
    %c9_90 = arith.constant 9 : index
    %c0_91 = arith.constant 0 : index
    %249 = vector.load %arg8[%c9_90, %c0_91] : memref<16x32xf32, #tpu.memory_space<vmem>>, vector<1x32xf32>
    %250 = vector.shape_cast %249 : vector<1x32xf32> to vector<32xf32>
    %251 = vector.shape_cast %250 : vector<32xf32> to vector<1x32xf32>
    %252 = vector.broadcast %251 : vector<1x32xf32> to vector<8x32xf32>
    %253 = arith.addf %248, %252 : vector<8x32xf32>
    %cst_92 = arith.constant 0.000000e+00 : f32
    %254 = vector.broadcast %cst_92 : f32 to vector<8x32xf32>
    %255 = arith.maximumf %253, %254 : vector<8x32xf32>
    %c9_93 = arith.constant 9 : index
    %c0_94 = arith.constant 0 : index
    %256 = vector.load %arg9[%c9_93, %c0_94] : memref<16x32xf32, #tpu.memory_space<vmem>>, vector<1x32xf32>
    %257 = vector.shape_cast %256 : vector<1x32xf32> to vector<32xf32>
    %258 = vector.shape_cast %257 : vector<32xf32> to vector<1x32xf32>
    %259 = vector.broadcast %258 : vector<1x32xf32> to vector<8x32xf32>
    %260 = arith.mulf %255, %259 : vector<8x32xf32>
    %261 = arith.addf %237, %260 : vector<8x32xf32>
    %c10 = arith.constant 10 : index
    %c0_95 = arith.constant 0 : index
    %262 = vector.load %arg6[%c10, %c0_95] : memref<16x32xf32, #tpu.memory_space<vmem>>, vector<1x32xf32>
    %263 = vector.shape_cast %262 : vector<1x32xf32> to vector<32xf32>
    %264 = vector.shape_cast %263 : vector<32xf32> to vector<1x32xf32>
    %265 = vector.broadcast %264 : vector<1x32xf32> to vector<8x32xf32>
    %266 = arith.mulf %21, %265 : vector<8x32xf32>
    %c10_96 = arith.constant 10 : index
    %c0_97 = arith.constant 0 : index
    %267 = vector.load %arg7[%c10_96, %c0_97] : memref<16x32xf32, #tpu.memory_space<vmem>>, vector<1x32xf32>
    %268 = vector.shape_cast %267 : vector<1x32xf32> to vector<32xf32>
    %269 = vector.shape_cast %268 : vector<32xf32> to vector<1x32xf32>
    %270 = vector.broadcast %269 : vector<1x32xf32> to vector<8x32xf32>
    %271 = arith.mulf %22, %270 : vector<8x32xf32>
    %272 = arith.addf %266, %271 : vector<8x32xf32>
    %c10_98 = arith.constant 10 : index
    %c0_99 = arith.constant 0 : index
    %273 = vector.load %arg8[%c10_98, %c0_99] : memref<16x32xf32, #tpu.memory_space<vmem>>, vector<1x32xf32>
    %274 = vector.shape_cast %273 : vector<1x32xf32> to vector<32xf32>
    %275 = vector.shape_cast %274 : vector<32xf32> to vector<1x32xf32>
    %276 = vector.broadcast %275 : vector<1x32xf32> to vector<8x32xf32>
    %277 = arith.addf %272, %276 : vector<8x32xf32>
    %cst_100 = arith.constant 0.000000e+00 : f32
    %278 = vector.broadcast %cst_100 : f32 to vector<8x32xf32>
    %279 = arith.maximumf %277, %278 : vector<8x32xf32>
    %c10_101 = arith.constant 10 : index
    %c0_102 = arith.constant 0 : index
    %280 = vector.load %arg9[%c10_101, %c0_102] : memref<16x32xf32, #tpu.memory_space<vmem>>, vector<1x32xf32>
    %281 = vector.shape_cast %280 : vector<1x32xf32> to vector<32xf32>
    %282 = vector.shape_cast %281 : vector<32xf32> to vector<1x32xf32>
    %283 = vector.broadcast %282 : vector<1x32xf32> to vector<8x32xf32>
    %284 = arith.mulf %279, %283 : vector<8x32xf32>
    %285 = arith.addf %261, %284 : vector<8x32xf32>
    %c11 = arith.constant 11 : index
    %c0_103 = arith.constant 0 : index
    %286 = vector.load %arg6[%c11, %c0_103] : memref<16x32xf32, #tpu.memory_space<vmem>>, vector<1x32xf32>
    %287 = vector.shape_cast %286 : vector<1x32xf32> to vector<32xf32>
    %288 = vector.shape_cast %287 : vector<32xf32> to vector<1x32xf32>
    %289 = vector.broadcast %288 : vector<1x32xf32> to vector<8x32xf32>
    %290 = arith.mulf %21, %289 : vector<8x32xf32>
    %c11_104 = arith.constant 11 : index
    %c0_105 = arith.constant 0 : index
    %291 = vector.load %arg7[%c11_104, %c0_105] : memref<16x32xf32, #tpu.memory_space<vmem>>, vector<1x32xf32>
    %292 = vector.shape_cast %291 : vector<1x32xf32> to vector<32xf32>
    %293 = vector.shape_cast %292 : vector<32xf32> to vector<1x32xf32>
    %294 = vector.broadcast %293 : vector<1x32xf32> to vector<8x32xf32>
    %295 = arith.mulf %22, %294 : vector<8x32xf32>
    %296 = arith.addf %290, %295 : vector<8x32xf32>
    %c11_106 = arith.constant 11 : index
    %c0_107 = arith.constant 0 : index
    %297 = vector.load %arg8[%c11_106, %c0_107] : memref<16x32xf32, #tpu.memory_space<vmem>>, vector<1x32xf32>
    %298 = vector.shape_cast %297 : vector<1x32xf32> to vector<32xf32>
    %299 = vector.shape_cast %298 : vector<32xf32> to vector<1x32xf32>
    %300 = vector.broadcast %299 : vector<1x32xf32> to vector<8x32xf32>
    %301 = arith.addf %296, %300 : vector<8x32xf32>
    %cst_108 = arith.constant 0.000000e+00 : f32
    %302 = vector.broadcast %cst_108 : f32 to vector<8x32xf32>
    %303 = arith.maximumf %301, %302 : vector<8x32xf32>
    %c11_109 = arith.constant 11 : index
    %c0_110 = arith.constant 0 : index
    %304 = vector.load %arg9[%c11_109, %c0_110] : memref<16x32xf32, #tpu.memory_space<vmem>>, vector<1x32xf32>
    %305 = vector.shape_cast %304 : vector<1x32xf32> to vector<32xf32>
    %306 = vector.shape_cast %305 : vector<32xf32> to vector<1x32xf32>
    %307 = vector.broadcast %306 : vector<1x32xf32> to vector<8x32xf32>
    %308 = arith.mulf %303, %307 : vector<8x32xf32>
    %309 = arith.addf %285, %308 : vector<8x32xf32>
    %c12 = arith.constant 12 : index
    %c0_111 = arith.constant 0 : index
    %310 = vector.load %arg6[%c12, %c0_111] : memref<16x32xf32, #tpu.memory_space<vmem>>, vector<1x32xf32>
    %311 = vector.shape_cast %310 : vector<1x32xf32> to vector<32xf32>
    %312 = vector.shape_cast %311 : vector<32xf32> to vector<1x32xf32>
    %313 = vector.broadcast %312 : vector<1x32xf32> to vector<8x32xf32>
    %314 = arith.mulf %21, %313 : vector<8x32xf32>
    %c12_112 = arith.constant 12 : index
    %c0_113 = arith.constant 0 : index
    %315 = vector.load %arg7[%c12_112, %c0_113] : memref<16x32xf32, #tpu.memory_space<vmem>>, vector<1x32xf32>
    %316 = vector.shape_cast %315 : vector<1x32xf32> to vector<32xf32>
    %317 = vector.shape_cast %316 : vector<32xf32> to vector<1x32xf32>
    %318 = vector.broadcast %317 : vector<1x32xf32> to vector<8x32xf32>
    %319 = arith.mulf %22, %318 : vector<8x32xf32>
    %320 = arith.addf %314, %319 : vector<8x32xf32>
    %c12_114 = arith.constant 12 : index
    %c0_115 = arith.constant 0 : index
    %321 = vector.load %arg8[%c12_114, %c0_115] : memref<16x32xf32, #tpu.memory_space<vmem>>, vector<1x32xf32>
    %322 = vector.shape_cast %321 : vector<1x32xf32> to vector<32xf32>
    %323 = vector.shape_cast %322 : vector<32xf32> to vector<1x32xf32>
    %324 = vector.broadcast %323 : vector<1x32xf32> to vector<8x32xf32>
    %325 = arith.addf %320, %324 : vector<8x32xf32>
    %cst_116 = arith.constant 0.000000e+00 : f32
    %326 = vector.broadcast %cst_116 : f32 to vector<8x32xf32>
    %327 = arith.maximumf %325, %326 : vector<8x32xf32>
    %c12_117 = arith.constant 12 : index
    %c0_118 = arith.constant 0 : index
    %328 = vector.load %arg9[%c12_117, %c0_118] : memref<16x32xf32, #tpu.memory_space<vmem>>, vector<1x32xf32>
    %329 = vector.shape_cast %328 : vector<1x32xf32> to vector<32xf32>
    %330 = vector.shape_cast %329 : vector<32xf32> to vector<1x32xf32>
    %331 = vector.broadcast %330 : vector<1x32xf32> to vector<8x32xf32>
    %332 = arith.mulf %327, %331 : vector<8x32xf32>
    %333 = arith.addf %309, %332 : vector<8x32xf32>
    %c13 = arith.constant 13 : index
    %c0_119 = arith.constant 0 : index
    %334 = vector.load %arg6[%c13, %c0_119] : memref<16x32xf32, #tpu.memory_space<vmem>>, vector<1x32xf32>
    %335 = vector.shape_cast %334 : vector<1x32xf32> to vector<32xf32>
    %336 = vector.shape_cast %335 : vector<32xf32> to vector<1x32xf32>
    %337 = vector.broadcast %336 : vector<1x32xf32> to vector<8x32xf32>
    %338 = arith.mulf %21, %337 : vector<8x32xf32>
    %c13_120 = arith.constant 13 : index
    %c0_121 = arith.constant 0 : index
    %339 = vector.load %arg7[%c13_120, %c0_121] : memref<16x32xf32, #tpu.memory_space<vmem>>, vector<1x32xf32>
    %340 = vector.shape_cast %339 : vector<1x32xf32> to vector<32xf32>
    %341 = vector.shape_cast %340 : vector<32xf32> to vector<1x32xf32>
    %342 = vector.broadcast %341 : vector<1x32xf32> to vector<8x32xf32>
    %343 = arith.mulf %22, %342 : vector<8x32xf32>
    %344 = arith.addf %338, %343 : vector<8x32xf32>
    %c13_122 = arith.constant 13 : index
    %c0_123 = arith.constant 0 : index
    %345 = vector.load %arg8[%c13_122, %c0_123] : memref<16x32xf32, #tpu.memory_space<vmem>>, vector<1x32xf32>
    %346 = vector.shape_cast %345 : vector<1x32xf32> to vector<32xf32>
    %347 = vector.shape_cast %346 : vector<32xf32> to vector<1x32xf32>
    %348 = vector.broadcast %347 : vector<1x32xf32> to vector<8x32xf32>
    %349 = arith.addf %344, %348 : vector<8x32xf32>
    %cst_124 = arith.constant 0.000000e+00 : f32
    %350 = vector.broadcast %cst_124 : f32 to vector<8x32xf32>
    %351 = arith.maximumf %349, %350 : vector<8x32xf32>
    %c13_125 = arith.constant 13 : index
    %c0_126 = arith.constant 0 : index
    %352 = vector.load %arg9[%c13_125, %c0_126] : memref<16x32xf32, #tpu.memory_space<vmem>>, vector<1x32xf32>
    %353 = vector.shape_cast %352 : vector<1x32xf32> to vector<32xf32>
    %354 = vector.shape_cast %353 : vector<32xf32> to vector<1x32xf32>
    %355 = vector.broadcast %354 : vector<1x32xf32> to vector<8x32xf32>
    %356 = arith.mulf %351, %355 : vector<8x32xf32>
    %357 = arith.addf %333, %356 : vector<8x32xf32>
    %c14 = arith.constant 14 : index
    %c0_127 = arith.constant 0 : index
    %358 = vector.load %arg6[%c14, %c0_127] : memref<16x32xf32, #tpu.memory_space<vmem>>, vector<1x32xf32>
    %359 = vector.shape_cast %358 : vector<1x32xf32> to vector<32xf32>
    %360 = vector.shape_cast %359 : vector<32xf32> to vector<1x32xf32>
    %361 = vector.broadcast %360 : vector<1x32xf32> to vector<8x32xf32>
    %362 = arith.mulf %21, %361 : vector<8x32xf32>
    %c14_128 = arith.constant 14 : index
    %c0_129 = arith.constant 0 : index
    %363 = vector.load %arg7[%c14_128, %c0_129] : memref<16x32xf32, #tpu.memory_space<vmem>>, vector<1x32xf32>
    %364 = vector.shape_cast %363 : vector<1x32xf32> to vector<32xf32>
    %365 = vector.shape_cast %364 : vector<32xf32> to vector<1x32xf32>
    %366 = vector.broadcast %365 : vector<1x32xf32> to vector<8x32xf32>
    %367 = arith.mulf %22, %366 : vector<8x32xf32>
    %368 = arith.addf %362, %367 : vector<8x32xf32>
    %c14_130 = arith.constant 14 : index
    %c0_131 = arith.constant 0 : index
    %369 = vector.load %arg8[%c14_130, %c0_131] : memref<16x32xf32, #tpu.memory_space<vmem>>, vector<1x32xf32>
    %370 = vector.shape_cast %369 : vector<1x32xf32> to vector<32xf32>
    %371 = vector.shape_cast %370 : vector<32xf32> to vector<1x32xf32>
    %372 = vector.broadcast %371 : vector<1x32xf32> to vector<8x32xf32>
    %373 = arith.addf %368, %372 : vector<8x32xf32>
    %cst_132 = arith.constant 0.000000e+00 : f32
    %374 = vector.broadcast %cst_132 : f32 to vector<8x32xf32>
    %375 = arith.maximumf %373, %374 : vector<8x32xf32>
    %c14_133 = arith.constant 14 : index
    %c0_134 = arith.constant 0 : index
    %376 = vector.load %arg9[%c14_133, %c0_134] : memref<16x32xf32, #tpu.memory_space<vmem>>, vector<1x32xf32>
    %377 = vector.shape_cast %376 : vector<1x32xf32> to vector<32xf32>
    %378 = vector.shape_cast %377 : vector<32xf32> to vector<1x32xf32>
    %379 = vector.broadcast %378 : vector<1x32xf32> to vector<8x32xf32>
    %380 = arith.mulf %375, %379 : vector<8x32xf32>
    %381 = arith.addf %357, %380 : vector<8x32xf32>
    %c15 = arith.constant 15 : index
    %c0_135 = arith.constant 0 : index
    %382 = vector.load %arg6[%c15, %c0_135] : memref<16x32xf32, #tpu.memory_space<vmem>>, vector<1x32xf32>
    %383 = vector.shape_cast %382 : vector<1x32xf32> to vector<32xf32>
    %384 = vector.shape_cast %383 : vector<32xf32> to vector<1x32xf32>
    %385 = vector.broadcast %384 : vector<1x32xf32> to vector<8x32xf32>
    %386 = arith.mulf %21, %385 : vector<8x32xf32>
    %c15_136 = arith.constant 15 : index
    %c0_137 = arith.constant 0 : index
    %387 = vector.load %arg7[%c15_136, %c0_137] : memref<16x32xf32, #tpu.memory_space<vmem>>, vector<1x32xf32>
    %388 = vector.shape_cast %387 : vector<1x32xf32> to vector<32xf32>
    %389 = vector.shape_cast %388 : vector<32xf32> to vector<1x32xf32>
    %390 = vector.broadcast %389 : vector<1x32xf32> to vector<8x32xf32>
    %391 = arith.mulf %22, %390 : vector<8x32xf32>
    %392 = arith.addf %386, %391 : vector<8x32xf32>
    %c15_138 = arith.constant 15 : index
    %c0_139 = arith.constant 0 : index
    %393 = vector.load %arg8[%c15_138, %c0_139] : memref<16x32xf32, #tpu.memory_space<vmem>>, vector<1x32xf32>
    %394 = vector.shape_cast %393 : vector<1x32xf32> to vector<32xf32>
    %395 = vector.shape_cast %394 : vector<32xf32> to vector<1x32xf32>
    %396 = vector.broadcast %395 : vector<1x32xf32> to vector<8x32xf32>
    %397 = arith.addf %392, %396 : vector<8x32xf32>
    %cst_140 = arith.constant 0.000000e+00 : f32
    %398 = vector.broadcast %cst_140 : f32 to vector<8x32xf32>
    %399 = arith.maximumf %397, %398 : vector<8x32xf32>
    %c15_141 = arith.constant 15 : index
    %c0_142 = arith.constant 0 : index
    %400 = vector.load %arg9[%c15_141, %c0_142] : memref<16x32xf32, #tpu.memory_space<vmem>>, vector<1x32xf32>
    %401 = vector.shape_cast %400 : vector<1x32xf32> to vector<32xf32>
    %402 = vector.shape_cast %401 : vector<32xf32> to vector<1x32xf32>
    %403 = vector.broadcast %402 : vector<1x32xf32> to vector<8x32xf32>
    %404 = arith.mulf %399, %403 : vector<8x32xf32>
    %405 = arith.addf %381, %404 : vector<8x32xf32>
    %cst_143 = arith.constant dense<0xFF800000> : vector<8xf32>
    %406 = vector.multi_reduction <maximumf>, %405, %cst_143 [1] : vector<8x32xf32> to vector<8xf32>
    %407 = vector.shape_cast %406 : vector<8xf32> to vector<8x1xf32>
    %408 = vector.broadcast %407 : vector<8x1xf32> to vector<8x32xf32>
    %409 = arith.subf %405, %408 : vector<8x32xf32>
    %410 = math.exp %409 : vector<8x32xf32>
    %411 = vector.extract_strided_slice %410 {offsets = [0, 0], sizes = [8, 8], strides = [1, 1]} : vector<8x32xf32> to vector<8x8xf32>
    %cst_144 = arith.constant dense<0.000000e+00> : vector<8xf32>
    %412 = vector.multi_reduction <add>, %411, %cst_144 [1] : vector<8x8xf32> to vector<8xf32>
    %413 = vector.shape_cast %412 : vector<8xf32> to vector<8x1xf32>
    %414 = tpu.reciprocal %413 {approx = true} : vector<8x1xf32> -> vector<8x1xf32>
    %415 = vector.broadcast %414 : vector<8x1xf32> to vector<8x8xf32>
    %416 = arith.mulf %411, %415 : vector<8x8xf32>
    %417 = arith.truncf %416 : vector<8x8xf32> to vector<8x8xbf16>
    %418 = vector.extract_strided_slice %5 {offsets = [0, 0], sizes = [8, 8], strides = [1, 1]} : vector<8x32xbf16> to vector<8x8xbf16>
    %cst_145 = arith.constant dense<0.000000e+00> : vector<8x8xf32>
    %419 = tpu.matmul %417, %418, %cst_145 {dimension_numbers = #tpu.dot_dimension_numbers<[1], [0], [0], [1], [0, 0, 1, 1], [], []>} : vector<8x8xbf16>, vector<8x8xbf16>, vector<8x8xf32> -> vector<8x8xf32>
    %420 = vector.extract_strided_slice %410 {offsets = [0, 8], sizes = [8, 8], strides = [1, 1]} : vector<8x32xf32> to vector<8x8xf32>
    %cst_146 = arith.constant dense<0.000000e+00> : vector<8xf32>
    %421 = vector.multi_reduction <add>, %420, %cst_146 [1] : vector<8x8xf32> to vector<8xf32>
    %422 = vector.shape_cast %421 : vector<8xf32> to vector<8x1xf32>
    %423 = tpu.reciprocal %422 {approx = true} : vector<8x1xf32> -> vector<8x1xf32>
    %424 = vector.broadcast %423 : vector<8x1xf32> to vector<8x8xf32>
    %425 = arith.mulf %420, %424 : vector<8x8xf32>
    %426 = arith.truncf %425 : vector<8x8xf32> to vector<8x8xbf16>
    %427 = vector.extract_strided_slice %5 {offsets = [0, 8], sizes = [8, 8], strides = [1, 1]} : vector<8x32xbf16> to vector<8x8xbf16>
    %cst_147 = arith.constant dense<0.000000e+00> : vector<8x8xf32>
    %428 = tpu.matmul %426, %427, %cst_147 {dimension_numbers = #tpu.dot_dimension_numbers<[1], [0], [0], [1], [0, 0, 1, 1], [], []>} : vector<8x8xbf16>, vector<8x8xbf16>, vector<8x8xf32> -> vector<8x8xf32>
    %429 = vector.extract_strided_slice %410 {offsets = [0, 16], sizes = [8, 8], strides = [1, 1]} : vector<8x32xf32> to vector<8x8xf32>
    %cst_148 = arith.constant dense<0.000000e+00> : vector<8xf32>
    %430 = vector.multi_reduction <add>, %429, %cst_148 [1] : vector<8x8xf32> to vector<8xf32>
    %431 = vector.shape_cast %430 : vector<8xf32> to vector<8x1xf32>
    %432 = tpu.reciprocal %431 {approx = true} : vector<8x1xf32> -> vector<8x1xf32>
    %433 = vector.broadcast %432 : vector<8x1xf32> to vector<8x8xf32>
    %434 = arith.mulf %429, %433 : vector<8x8xf32>
    %435 = arith.truncf %434 : vector<8x8xf32> to vector<8x8xbf16>
    %436 = vector.extract_strided_slice %5 {offsets = [0, 16], sizes = [8, 8], strides = [1, 1]} : vector<8x32xbf16> to vector<8x8xbf16>
    %cst_149 = arith.constant dense<0.000000e+00> : vector<8x8xf32>
    %437 = tpu.matmul %435, %436, %cst_149 {dimension_numbers = #tpu.dot_dimension_numbers<[1], [0], [0], [1], [0, 0, 1, 1], [], []>} : vector<8x8xbf16>, vector<8x8xbf16>, vector<8x8xf32> -> vector<8x8xf32>
    %438 = vector.extract_strided_slice %410 {offsets = [0, 24], sizes = [8, 8], strides = [1, 1]} : vector<8x32xf32> to vector<8x8xf32>
    %cst_150 = arith.constant dense<0.000000e+00> : vector<8xf32>
    %439 = vector.multi_reduction <add>, %438, %cst_150 [1] : vector<8x8xf32> to vector<8xf32>
    %440 = vector.shape_cast %439 : vector<8xf32> to vector<8x1xf32>
    %441 = tpu.reciprocal %440 {approx = true} : vector<8x1xf32> -> vector<8x1xf32>
    %442 = vector.broadcast %441 : vector<8x1xf32> to vector<8x8xf32>
    %443 = arith.mulf %438, %442 : vector<8x8xf32>
    %444 = arith.truncf %443 : vector<8x8xf32> to vector<8x8xbf16>
    %445 = vector.extract_strided_slice %5 {offsets = [0, 24], sizes = [8, 8], strides = [1, 1]} : vector<8x32xbf16> to vector<8x8xbf16>
    %cst_151 = arith.constant dense<0.000000e+00> : vector<8x8xf32>
    %446 = tpu.matmul %444, %445, %cst_151 {dimension_numbers = #tpu.dot_dimension_numbers<[1], [0], [0], [1], [0, 0, 1, 1], [], []>} : vector<8x8xbf16>, vector<8x8xbf16>, vector<8x8xf32> -> vector<8x8xf32>
    %447 = tpu.concatenate %419, %428, %437, %446 in 1 : vector<8x8xf32>, vector<8x8xf32>, vector<8x8xf32>, vector<8x8xf32> -> vector<8x32xf32>
    %448 = arith.truncf %447 : vector<8x32xf32> to vector<8x32xbf16>
    %c0_152 = arith.constant 0 : index
    %c0_153 = arith.constant 0 : index
    %c0_154 = arith.constant 0 : index
    %449 = vector.load %arg10[%c0_152, %c0_153, %c0_154] : memref<1x8x32xbf16, #tpu.memory_space<vmem>>, vector<1x8x32xbf16>
    %450 = vector.shape_cast %449 : vector<1x8x32xbf16> to vector<8x32xbf16>
    %451 = vector.shape_cast %448 : vector<8x32xbf16> to vector<1x8x32xbf16>
    tpu.vector_store %arg10[%c0_152, %c0_153, %c0_154], %451 {strides = array<i32>} : memref<1x8x32xbf16, #tpu.memory_space<vmem>>, vector<1x8x32xbf16>,
    return
  }
  func.func @transform_0(%arg0: i32, %arg1: i32) -> (i32, i32, i32) {
    %c0_i32 = arith.constant 0 : i32
    %c0_i32_0 = arith.constant 0 : i32
    return %arg0, %arg1, %c0_i32 : i32, i32, i32
  }
  func.func @transform_1(%arg0: i32, %arg1: i32) -> (i32, i32, i32) {
    %c0_i32 = arith.constant 0 : i32
    %c0_i32_0 = arith.constant 0 : i32
    %c0_i32_1 = arith.constant 0 : i32
    return %arg0, %c0_i32, %c0_i32_0 : i32, i32, i32
  }
  func.func @transform_2(%arg0: i32, %arg1: i32) -> (i32, i32, i32) {
    %c0_i32 = arith.constant 0 : i32
    %c0_i32_0 = arith.constant 0 : i32
    %c0_i32_1 = arith.constant 0 : i32
    return %arg0, %c0_i32, %c0_i32_0 : i32, i32, i32
  }
  func.func @transform_3(%arg0: i32, %arg1: i32) -> (i32, i32, i32) {
    %c0_i32 = arith.constant 0 : i32
    %c0_i32_0 = arith.constant 0 : i32
    return %arg0, %arg1, %c0_i32 : i32, i32, i32
  }
  func.func @transform_4(%arg0: i32, %arg1: i32) -> (i32, i32) {
    %c0_i32 = arith.constant 0 : i32
    %c0_i32_0 = arith.constant 0 : i32
    %c0_i32_1 = arith.constant 0 : i32
    return %c0_i32, %c0_i32_0 : i32, i32
  }
  func.func @transform_5(%arg0: i32, %arg1: i32) -> (i32, i32) {
    %c0_i32 = arith.constant 0 : i32
    %c0_i32_0 = arith.constant 0 : i32
    %c0_i32_1 = arith.constant 0 : i32
    return %c0_i32, %c0_i32_0 : i32, i32
  }
  func.func @transform_6(%arg0: i32, %arg1: i32) -> (i32, i32) {
    %c0_i32 = arith.constant 0 : i32
    %c0_i32_0 = arith.constant 0 : i32
    %c0_i32_1 = arith.constant 0 : i32
    return %c0_i32, %c0_i32_0 : i32, i32
  }
  func.func @transform_7(%arg0: i32, %arg1: i32) -> (i32, i32) {
    %c0_i32 = arith.constant 0 : i32
    %c0_i32_0 = arith.constant 0 : i32
    %c0_i32_1 = arith.constant 0 : i32
    return %c0_i32, %c0_i32_0 : i32, i32
  }
  func.func @transform_8(%arg0: i32, %arg1: i32) -> (i32, i32, i32) {
    %c0_i32 = arith.constant 0 : i32
    %c0_i32_0 = arith.constant 0 : i32
    return %arg0, %arg1, %c0_i32 : i32, i32, i32
  }
}

</mosaic_0001>

<llo_original>
// kernel: tpu_custom_call.1
$region0: #{tpu_custom_call.1}
  #allocation0 [shape = 'u32[]', space=smem, size = 0x4, offset = 0x4, fixed_abs, tag = 'smem constant byte address 0x4 - core index']
  #allocation1 [shape = 'u32[72,128]{1,0:T(1,128)}', space=vmem, size = 0x9000, scoped, tag = 'internal scratch']
  %s0 = inlined_call_operand.hbm [shape: bf16[2,8,32], index: 0, kind: input, shape index: {}]
  %s1 = inlined_call_operand.hbm [shape: bf16[2,8,32], index: 1, kind: input, shape index: {}]
  %s2 = inlined_call_operand.hbm [shape: bf16[2,8,32], index: 2, kind: input, shape index: {}]
  %s3 = inlined_call_operand.hbm [shape: bf16[2,8,8], index: 3, kind: input, shape index: {}]
  %s4 = inlined_call_operand.hbm [shape: f32[16,32], index: 4, kind: input, shape index: {}]
  %s5 = inlined_call_operand.hbm [shape: f32[16,32], index: 5, kind: input, shape index: {}]
  %s6 = inlined_call_operand.hbm [shape: f32[16,32], index: 6, kind: input, shape index: {}]
  %s7 = inlined_call_operand.hbm [shape: f32[16,32], index: 7, kind: input, shape index: {}]
  %s8 = inlined_call_operand.hbm [shape: bf16[2,8,32], index: 8, kind: output, shape index: {}]
  %s9 = sld [smem:[#allocation0]]
  $region97: #{tpu_custom_call.1} parent=0
    _
  %s11 = ssub.s32 1, %s9
  %s12 = scalar_select 0, %s11, %s9
  $region1: #{tpu_custom_call.1} parent=0
    #allocation2 [shape = 'u8[4096]{0}', space=vmem, size = 0x1000, scoped, tag = 'input window, operand 0']
    #allocation3 [shape = 's32[2]{0}', space=sflag, size = 0x8, scoped, tag = 'scoped memory for tpu_custom_call.1']
    #allocation4 [shape = 's32[2]{0}', space=sflag, size = 0x8, scoped, tag = 'scoped memory for tpu_custom_call.1']
    #allocation5 [shape = 'u8[4096]{0}', space=vmem, size = 0x1000, scoped, tag = 'input window, operand 1']
    #allocation6 [shape = 's32[2]{0}', space=sflag, size = 0x8, scoped, tag = 'scoped memory for tpu_custom_call.1']
    #allocation7 [shape = 'u8[4096]{0}', space=vmem, size = 0x1000, scoped, tag = 'input window, operand 2']
    #allocation8 [shape = 'u8[4096]{0}', space=vmem, size = 0x1000, scoped, tag = 'input window, operand 3']
    #allocation9 [shape = 's32[2]{0}', space=sflag, size = 0x8, scoped, tag = 'scoped memory for tpu_custom_call.1']
    #allocation10 [shape = 'u8[8192]{0}', space=vmem, size = 0x2000, scoped, tag = 'input window, operand 4, single buffered']
    #allocation11 [shape = 'u8[8192]{0}', space=vmem, size = 0x2000, scoped, tag = 'input window, operand 5, single buffered']
    #allocation12 [shape = 's32[1]{0}', space=sflag, size = 0x4, scoped, tag = 'scoped memory for tpu_custom_call.1']
    #allocation13 [shape = 'u8[8192]{0}', space=vmem, size = 0x2000, scoped, tag = 'input window, operand 6, single buffered']
    #allocation14 [shape = 'u8[8192]{0}', space=vmem, size = 0x2000, scoped, tag = 'input window, operand 7, single buffered']
    #allocation15 [shape = 's32[1]{0}', space=sflag, size = 0x4, scoped, tag = 'scoped memory for tpu_custom_call.1']
    #allocation16 [shape = 'u8[4096]{0}', space=vmem, size = 0x1000, scoped, tag = 'output window, operand 0']
    %13 = vsyncpa [#allocation3], 0
    %s14 = scalar_lea.sflag [#allocation3], 1
    %15 = vsyncpa %s14, 0
    %16 = vsyncpa [#allocation6], 0
    %s17 = scalar_lea.sflag [#allocation6], 1
    %18 = vsyncpa %s17, 0
    %19 = vsyncpa [#allocation9], 0
    %s20 = scalar_lea.sflag [#allocation9], 1
    %21 = vsyncpa %s20, 0
    %22 = vsyncpa [#allocation12], 0
    %23 = vsyncpa [#allocation15], 0
    %24 = vsyncpa [#allocation4], 0
    %s25 = scalar_lea.sflag [#allocation4], 1
    %26 = vsyncpa %s25, 0
    loop: start=0, step=1, limit=4
    $region2: #{tpu_custom_call.1} parent=1 // loop_pre_header
      _
    $region3: #{tpu_custom_call.1} parent=1 // loop_header
      %s28 = sphi 0, %s32
      %p29 = scmp.ge.s32.totalorder %s28, 4
      %s35 = sphi 0, %s47
      %s36 = sphi 0, %s43
      %s37 = sphi 0, %s35
      %s38 = sphi 0, %s36
      %s39 = sphi 0, %s37
      %s40 = sphi 0, %s38
      %s52 = sphi 0, %s54
      %s55 = sphi 0, %s52
      %s56 = sphi 0, %s55
      %s72 = sphi 0, %s56
      %s78 = sphi 0, %s80
      %s81 = sphi 0, %s78
      %s82 = sphi 0, %s81
      %s98 = sphi 0, %s82
      %s104 = sphi 0, %s106
      %s107 = sphi 0, %s104
      %s108 = sphi 0, %s107
      %s124 = sphi 0, %s108
      %s132 = sphi 0, %s134
      %s135 = sphi 0, %s132
      %s136 = sphi 0, %s135
      %s152 = sphi 0, %s136
      %s156 = sphi 0, %s156
      %s158 = sphi 0, %s156
      %s159 = sphi 0, %s158
      %s173 = sphi 0, %s159
      %s177 = sphi 0, %s177
      %s179 = sphi 0, %s177
      %s180 = sphi 0, %s179
      %s194 = sphi 0, %s180
      %s198 = sphi 0, %s198
      %s200 = sphi 0, %s198
      %s201 = sphi 0, %s200
      %s215 = sphi 0, %s201
      %s219 = sphi 0, %s219
      %s221 = sphi 0, %s219
      %s222 = sphi 0, %s221
      %s236 = sphi 0, %s222
      %s244 = sphi 0, %s246
      %s247 = sphi 0, %s244
      %s248 = sphi 0, %s247
      %s264 = sphi 0, %s248
    $region4: #{tpu_custom_call.1} parent=1 // loop_header_branch
      %31 = sbr.rel (%p29) target = $region8
    $region5: #{tpu_custom_call.1} parent=1 // loop_body
      %s33 = ssub.s32 %s28, 1
      %s34 = ssub.s32 %s28, 2
      %s41 = sadd.s32 1, %s36
      %p42 = scmp.ge.s32.totalorder %s41, 1
      %s43 = scalar_select %p42, 0, %s41
      %s44 = sadd.s32 1, %s35
      %s45 = scalar_select %p42, %s44, %s35
      %p46 = scmp.ge.s32.totalorder %s45, 2
      %s47 = scalar_select %p46, 0, %s45
      %s48 = ssub.s32 %s35, %s47
      %s49 = ssub.s32 %s36, %s43
      %s50 = sor.u32 %s48, %s49
      %p51 = scmp.eq.s32.totalorder %s50, 0
      %s53 = sadd.s32 %s52, 1
      %s54 = scalar_select %p51, %s52, %s53
      %p57 = pneg %p51
      %p58 = scmp.eq.s32.totalorder %s28, 1
      %p59 = por %p57, %p58
      %p60 = scmp.ne.s32.totalorder %s52, %s55
      %p61 = scmp.eq.s32.totalorder %s28, 0
      %p62 = por %p60, %p61
      %p63 = scmp.ne.s32.totalorder %s52, %s55
      %p64 = scmp.eq.s32.totalorder %s33, 1
      %p65 = por %p63, %p64
      %p66 = scmp.ne.s32.totalorder %s55, %s56
      %p67 = scmp.eq.s32.totalorder %s33, 0
      %p68 = por %p66, %p67
      %p69 = scmp.ne.s32.totalorder %s55, %s56
      %p70 = scmp.eq.s32.totalorder %s34, 1
      %p71 = por %p69, %p70
      %p73 = scmp.ne.s32.totalorder %s56, %s72
      %p74 = scmp.eq.s32.totalorder %s34, 0
      %p75 = por %p73, %p74
      %s76 = ssub.s32 %s35, %s47
      %p77 = scmp.eq.s32.totalorder %s76, 0
      %s79 = sadd.s32 %s78, 1
      %s80 = scalar_select %p77, %s78, %s79
      %p83 = pneg %p77
      %p84 = scmp.eq.s32.totalorder %s28, 1
      %p85 = por %p83, %p84
      %p86 = scmp.ne.s32.totalorder %s78, %s81
      %p87 = scmp.eq.s32.totalorder %s28, 0
      %p88 = por %p86, %p87
      %p89 = scmp.ne.s32.totalorder %s78, %s81
      %p90 = scmp.eq.s32.totalorder %s33, 1
      %p91 = por %p89, %p90
      %p92 = scmp.ne.s32.totalorder %s81, %s82
      %p93 = scmp.eq.s32.totalorder %s33, 0
      %p94 = por %p92, %p93
      %p95 = scmp.ne.s32.totalorder %s81, %s82
      %p96 = scmp.eq.s32.totalorder %s34, 1
      %p97 = por %p95, %p96
      %p99 = scmp.ne.s32.totalorder %s82, %s98
      %p100 = scmp.eq.s32.totalorder %s34, 0
      %p101 = por %p99, %p100
      %s102 = ssub.s32 %s35, %s47
      %p103 = scmp.eq.s32.totalorder %s102, 0
      %s105 = sadd.s32 %s104, 1
      %s106 = scalar_select %p103, %s104, %s105
      %p109 = pneg %p103
      %p110 = scmp.eq.s32.totalorder %s28, 1
      %p111 = por %p109, %p110
      %p112 = scmp.ne.s32.totalorder %s104, %s107
      %p113 = scmp.eq.s32.totalorder %s28, 0
      %p114 = por %p112, %p113
      %p115 = scmp.ne.s32.totalorder %s104, %s107
      %p116 = scmp.eq.s32.totalorder %s33, 1
      %p117 = por %p115, %p116
      %p118 = scmp.ne.s32.totalorder %s107, %s108
      %p119 = scmp.eq.s32.totalorder %s33, 0
      %p120 = por %p118, %p119
      %p121 = scmp.ne.s32.totalorder %s107, %s108
      %p122 = scmp.eq.s32.totalorder %s34, 1
      %p123 = por %p121, %p122
      %p125 = scmp.ne.s32.totalorder %s108, %s124
      %p126 = scmp.eq.s32.totalorder %s34, 0
      %p127 = por %p125, %p126
      %s128 = ssub.s32 %s35, %s47
      %s129 = ssub.s32 %s36, %s43
      %s130 = sor.u32 %s128, %s129
      %p131 = scmp.eq.s32.totalorder %s130, 0
      %s133 = sadd.s32 %s132, 1
      %s134 = scalar_select %p131, %s132, %s133
      %p137 = pneg %p131
      %p138 = scmp.eq.s32.totalorder %s28, 1
      %p139 = por %p137, %p138
      %p140 = scmp.ne.s32.totalorder %s132, %s135
      %p141 = scmp.eq.s32.totalorder %s28, 0
      %p142 = por %p140, %p141
      %p143 = scmp.ne.s32.totalorder %s132, %s135
      %p144 = scmp.eq.s32.totalorder %s33, 1
      %p145 = por %p143, %p144
      %p146 = scmp.ne.s32.totalorder %s135, %s136
      %p147 = scmp.eq.s32.totalorder %s33, 0
      %p148 = por %p146, %p147
      %p149 = scmp.ne.s32.totalorder %s135, %s136
      %p150 = scmp.eq.s32.totalorder %s34, 1
      %p151 = por %p149, %p150
      %p153 = scmp.ne.s32.totalorder %s136, %s152
      %p154 = scmp.eq.s32.totalorder %s34, 0
      %p155 = por %p153, %p154
      %s157 = sadd.s32 %s156, 1
      %p160 = scmp.eq.s32.totalorder %s28, 1
      %p161 = scmp.ne.s32.totalorder %s156, %s158
      %p162 = scmp.eq.s32.totalorder %s28, 0
      %p163 = por %p161, %p162
      %p164 = scmp.ne.s32.totalorder %s156, %s158
      %p165 = scmp.eq.s32.totalorder %s33, 1
      %p166 = por %p164, %p165
      %p167 = scmp.ne.s32.totalorder %s158, %s159
      %p168 = scmp.eq.s32.totalorder %s33, 0
      %p169 = por %p167, %p168
      %p170 = scmp.ne.s32.totalorder %s158, %s159
      %p171 = scmp.eq.s32.totalorder %s34, 1
      %p172 = por %p170, %p171
      %p174 = scmp.ne.s32.totalorder %s159, %s173
      %p175 = scmp.eq.s32.totalorder %s34, 0
      %p176 = por %p174, %p175
      %s178 = sadd.s32 %s177, 1
      %p181 = scmp.eq.s32.totalorder %s28, 1
      %p182 = scmp.ne.s32.totalorder %s177, %s179
      %p183 = scmp.eq.s32.totalorder %s28, 0
      %p184 = por %p182, %p183
      %p185 = scmp.ne.s32.totalorder %s177, %s179
      %p186 = scmp.eq.s32.totalorder %s33, 1
      %p187 = por %p185, %p186
      %p188 = scmp.ne.s32.totalorder %s179, %s180
      %p189 = scmp.eq.s32.totalorder %s33, 0
      %p190 = por %p188, %p189
      %p191 = scmp.ne.s32.totalorder %s179, %s180
      %p192 = scmp.eq.s32.totalorder %s34, 1
      %p193 = por %p191, %p192
      %p195 = scmp.ne.s32.totalorder %s180, %s194
      %p196 = scmp.eq.s32.totalorder %s34, 0
      %p197 = por %p195, %p196
      %s199 = sadd.s32 %s198, 1
      %p202 = scmp.eq.s32.totalorder %s28, 1
      %p203 = scmp.ne.s32.totalorder %s198, %s200
      %p204 = scmp.eq.s32.totalorder %s28, 0
      %p205 = por %p203, %p204
      %p206 = scmp.ne.s32.totalorder %s198, %s200
      %p207 = scmp.eq.s32.totalorder %s33, 1
      %p208 = por %p206, %p207
      %p209 = scmp.ne.s32.totalorder %s200, %s201
      %p210 = scmp.eq.s32.totalorder %s33, 0
      %p211 = por %p209, %p210
      %p212 = scmp.ne.s32.totalorder %s200, %s201
      %p213 = scmp.eq.s32.totalorder %s34, 1
      %p214 = por %p212, %p213
      %p216 = scmp.ne.s32.totalorder %s201, %s215
      %p217 = scmp.eq.s32.totalorder %s34, 0
      %p218 = por %p216, %p217
      %s220 = sadd.s32 %s219, 1
      %p223 = scmp.eq.s32.totalorder %s28, 1
      %p224 = scmp.ne.s32.totalorder %s219, %s221
      %p225 = scmp.eq.s32.totalorder %s28, 0
      %p226 = por %p224, %p225
      %p227 = scmp.ne.s32.totalorder %s219, %s221
      %p228 = scmp.eq.s32.totalorder %s33, 1
      %p229 = por %p227, %p228
      %p230 = scmp.ne.s32.totalorder %s221, %s222
      %p231 = scmp.eq.s32.totalorder %s33, 0
      %p232 = por %p230, %p231
      %p233 = scmp.ne.s32.totalorder %s221, %s222
      %p234 = scmp.eq.s32.totalorder %s34, 1
      %p235 = por %p233, %p234
      %p237 = scmp.ne.s32.totalorder %s222, %s236
      %p238 = scmp.eq.s32.totalorder %s34, 0
      %p239 = por %p237, %p238
      %s240 = ssub.s32 %s35, %s47
      %s241 = ssub.s32 %s36, %s43
      %s242 = sor.u32 %s240, %s241
      %p243 = scmp.eq.s32.totalorder %s242, 0
      %s245 = sadd.s32 %s244, 1
      %s246 = scalar_select %p243, %s244, %s245
      %p249 = pneg %p243
      %p250 = scmp.eq.s32.totalorder %s28, 1
      %p251 = por %p249, %p250
      %p252 = scmp.ne.s32.totalorder %s244, %s247
      %p253 = scmp.eq.s32.totalorder %s28, 0
      %p254 = por %p252, %p253
      %p255 = scmp.ne.s32.totalorder %s244, %s247
      %p256 = scmp.eq.s32.totalorder %s33, 1
      %p257 = por %p255, %p256
      %p258 = scmp.ne.s32.totalorder %s247, %s248
      %p259 = scmp.eq.s32.totalorder %s33, 0
      %p260 = por %p258, %p259
      %p261 = scmp.ne.s32.totalorder %s247, %s248
      %p262 = scmp.eq.s32.totalorder %s34, 1
      %p263 = por %p261, %p262
      %p265 = scmp.ne.s32.totalorder %s248, %s264
      %p266 = scmp.eq.s32.totalorder %s34, 0
      %p267 = por %p265, %p266
      %p268 = scmp.le.s32.totalorder 1, %s28
      %p269 = scmp.lt.s32.totalorder %s28, 3
      %p270 = pnand %p268, %p269
      %p271 = pneg %p270
      // Predicated region
      $region9: #{tpu_custom_call.1} parent=5 // pred_check
        _
      $region10: #{tpu_custom_call.1} parent=5 // pred_check_branch
        %273 = sbr.rel (%p270) target = $region12
      $region11: #{tpu_custom_call.1} parent=5 // pred_region
        %s274 = ssub.s32 %s28, 1
        // Predicated region
        $region13: #{tpu_custom_call.1} parent=11 // pred_check
          %p275 = pneg %p169
        $region14: #{tpu_custom_call.1} parent=11 // pred_check_branch
          %277 = sbr.rel (%p275) target = $region16
        $region15: #{tpu_custom_call.1} parent=11 // pred_region
          %279 = vsyncadd [#allocation9], 0
          %s280 = sshll.u32 %s4, 4
          %s281 = int_to_ptr.hbm [resolvable:$true] %s280
          %s282 = sshll.u32 [#allocation10], 4
          %s283 = int_to_ptr.vmem [resolvable:$true] %s282
          %288 = dma.hbm_to_vmem [thread:$0]  %s281, 256, %s283, [#allocation9], 128, 128, 8
        $region16: #{tpu_custom_call.1} parent=11 // pred_fallthru
          _
        // Predicated region
        $region17: #{tpu_custom_call.1} parent=11 // pred_check
          %p289 = pneg %p190
        $region18: #{tpu_custom_call.1} parent=11 // pred_check_branch
          %291 = sbr.rel (%p289) target = $region20
        $region19: #{tpu_custom_call.1} parent=11 // pred_region
          %293 = vsyncadd [#allocation12], 0
          %s294 = sshll.u32 %s5, 4
          %s295 = int_to_ptr.hbm [resolvable:$true] %s294
          %s296 = sshll.u32 [#allocation11], 4
          %s297 = int_to_ptr.vmem [resolvable:$true] %s296
          %302 = dma.hbm_to_vmem [thread:$0]  %s295, 256, %s297, [#allocation12], 128, 128, 8
        $region20: #{tpu_custom_call.1} parent=11 // pred_fallthru
          _
        // Predicated region
        $region21: #{tpu_custom_call.1} parent=11 // pred_check
          %p303 = pneg %p211
        $region22: #{tpu_custom_call.1} parent=11 // pred_check_branch
          %305 = sbr.rel (%p303) target = $region24
        $region23: #{tpu_custom_call.1} parent=11 // pred_region
          %307 = vsyncadd [#allocation12], 0
          %s308 = sshll.u32 %s6, 4
          %s309 = int_to_ptr.hbm [resolvable:$true] %s308
          %s310 = sshll.u32 [#allocation13], 4
          %s311 = int_to_ptr.vmem [resolvable:$true] %s310
          %316 = dma.hbm_to_vmem [thread:$0]  %s309, 256, %s311, [#allocation12], 128, 128, 8
        $region24: #{tpu_custom_call.1} parent=11 // pred_fallthru
          _
        // Predicated region
        $region25: #{tpu_custom_call.1} parent=11 // pred_check
          %p317 = pneg %p232
        $region26: #{tpu_custom_call.1} parent=11 // pred_check_branch
          %319 = sbr.rel (%p317) target = $region28
        $region27: #{tpu_custom_call.1} parent=11 // pred_region
          %321 = vsyncadd [#allocation15], 0
          %s322 = sshll.u32 %s7, 4
          %s323 = int_to_ptr.hbm [resolvable:$true] %s322
          %s324 = sshll.u32 [#allocation14], 4
          %s325 = int_to_ptr.vmem [resolvable:$true] %s324
          %330 = dma.hbm_to_vmem [thread:$0]  %s323, 256, %s325, [#allocation15], 128, 128, 8
        $region28: #{tpu_custom_call.1} parent=11 // pred_fallthru
          _
      $region12: #{tpu_custom_call.1} parent=5 // pred_fallthru
        _
      %p331 = scmp.lt.s32.totalorder %s28, 2
      // Predicated region
      $region29: #{tpu_custom_call.1} parent=5 // pred_check
        %p332 = pneg %p331
      $region30: #{tpu_custom_call.1} parent=5 // pred_check_branch
        %334 = sbr.rel (%p332) target = $region32
      $region31: #{tpu_custom_call.1} parent=5 // pred_region
        // Predicated region
        $region33: #{tpu_custom_call.1} parent=31 // pred_check
          %p335 = pneg %p62
        $region34: #{tpu_custom_call.1} parent=31 // pred_check_branch
          %337 = sbr.rel (%p335) target = $region36
        $region35: #{tpu_custom_call.1} parent=31 // pred_region
          %s338 = sand.u32 %s52, 1
          %s339 = scalar_lea.sflag [#allocation3], %s338
          %s340 = sand.u32 %s52, 1
          %s341 = smul.addr %s340, 4
          %s342 = scalar_lea.vmem [#allocation2], %s341
          %344 = vsyncadd %s339, 0
          %s345 = sadd.s32 %s36, %s35
          %s346 = smul.addr %s345, 4
          %s347 = scalar_lea.hbm %s0, %s346
          %s349 = sshll.u32 %s347, 4
          %s350 = int_to_ptr.hbm [resolvable:$true] %s349
          %s351 = sshll.u32 %s342, 4
          %s352 = int_to_ptr.vmem [resolvable:$true] %s351
          %354 = dma.hbm_to_vmem [thread:$0]  %s350, 64, %s352, %s339
        $region36: #{tpu_custom_call.1} parent=31 // pred_fallthru
          _
        // Predicated region
        $region37: #{tpu_custom_call.1} parent=31 // pred_check
          %p355 = pneg %p88
        $region38: #{tpu_custom_call.1} parent=31 // pred_check_branch
          %357 = sbr.rel (%p355) target = $region40
        $region39: #{tpu_custom_call.1} parent=31 // pred_region
          %s358 = sand.u32 %s28, 1
          %s359 = scalar_lea.sflag [#allocation6], %s358
          %s360 = sand.u32 %s78, 1
          %s361 = smul.addr %s360, 4
          %s362 = scalar_lea.vmem [#allocation5], %s361
          %364 = vsyncadd %s359, 0
          %s365 = smul.addr %s35, 4
          %s366 = scalar_lea.hbm %s1, %s365
          %s368 = sshll.u32 %s366, 4
          %s369 = int_to_ptr.hbm [resolvable:$true] %s368
          %s370 = sshll.u32 %s362, 4
          %s371 = int_to_ptr.vmem [resolvable:$true] %s370
          %373 = dma.hbm_to_vmem [thread:$0]  %s369, 64, %s371, %s359
        $region40: #{tpu_custom_call.1} parent=31 // pred_fallthru
          _
        // Predicated region
        $region41: #{tpu_custom_call.1} parent=31 // pred_check
          %p374 = pneg %p114
        $region42: #{tpu_custom_call.1} parent=31 // pred_check_branch
          %376 = sbr.rel (%p374) target = $region44
        $region43: #{tpu_custom_call.1} parent=31 // pred_region
          %s377 = sand.u32 %s28, 1
          %s378 = scalar_lea.sflag [#allocation6], %s377
          %s379 = sand.u32 %s104, 1
          %s380 = smul.addr %s379, 4
          %s381 = scalar_lea.vmem [#allocation7], %s380
          %383 = vsyncadd %s378, 0
          %s384 = smul.addr %s35, 4
          %s385 = scalar_lea.hbm %s2, %s384
          %s387 = sshll.u32 %s385, 4
          %s388 = int_to_ptr.hbm [resolvable:$true] %s387
          %s389 = sshll.u32 %s381, 4
          %s390 = int_to_ptr.vmem [resolvable:$true] %s389
          %392 = dma.hbm_to_vmem [thread:$0]  %s388, 64, %s390, %s378
        $region44: #{tpu_custom_call.1} parent=31 // pred_fallthru
          _
        // Predicated region
        $region45: #{tpu_custom_call.1} parent=31 // pred_check
          %p393 = pneg %p142
        $region46: #{tpu_custom_call.1} parent=31 // pred_check_branch
          %395 = sbr.rel (%p393) target = $region48
        $region47: #{tpu_custom_call.1} parent=31 // pred_region
          %s396 = sand.u32 %s28, 1
          %s397 = scalar_lea.sflag [#allocation9], %s396
          %s398 = sand.u32 %s132, 1
          %s399 = smul.addr %s398, 4
          %s400 = scalar_lea.vmem [#allocation8], %s399
          %402 = vsyncadd %s397, 0
          %s403 = sadd.s32 %s36, %s35
          %s404 = smul.addr %s403, 4
          %s405 = scalar_lea.hbm %s3, %s404
          %s407 = sshll.u32 %s405, 4
          %s408 = int_to_ptr.hbm [resolvable:$true] %s407
          %s409 = sshll.u32 %s400, 4
          %s410 = int_to_ptr.vmem [resolvable:$true] %s409
          %412 = dma.hbm_to_vmem [thread:$0]  %s408, 64, %s410, %s397
        $region48: #{tpu_custom_call.1} parent=31 // pred_fallthru
          _
      $region32: #{tpu_custom_call.1} parent=5 // pred_fallthru
        _
      %p413 = scmp.le.s32.totalorder 1, %s28
      %p414 = scmp.lt.s32.totalorder %s28, 3
      %p415 = pnand %p413, %p414
      %p416 = pneg %p415
      // Predicated region
      $region49: #{tpu_custom_call.1} parent=5 // pred_check
        _
      $region50: #{tpu_custom_call.1} parent=5 // pred_check_branch
        %418 = sbr.rel (%p415) target = $region52
      $region51: #{tpu_custom_call.1} parent=5 // pred_region
        %s419 = ssub.s32 %s28, 1
        %s420 = sand.u32 %s55, 1
        %s421 = scalar_lea.sflag [#allocation3], %s420
        %s422 = sand.u32 %s55, 1
        %s423 = smul.addr %s422, 4
        %s424 = scalar_lea.vmem [#allocation2], %s423
        // Predicated region
        $region53: #{tpu_custom_call.1} parent=51 // pred_check
          %p425 = pneg %p68
        $region54: #{tpu_custom_call.1} parent=51 // pred_check_branch
          %427 = sbr.rel (%p425) target = $region56
        $region55: #{tpu_custom_call.1} parent=51 // pred_region
          %429 = dma.done %s421, 64
        $region56: #{tpu_custom_call.1} parent=51 // pred_fallthru
          _
        %s430 = sand.u32 %s33, 1
        %s431 = scalar_lea.sflag [#allocation6], %s430
        %s432 = sand.u32 %s81, 1
        %s433 = smul.addr %s432, 4
        %s434 = scalar_lea.vmem [#allocation5], %s433
        // Predicated region
        $region57: #{tpu_custom_call.1} parent=51 // pred_check
          %p435 = pneg %p94
        $region58: #{tpu_custom_call.1} parent=51 // pred_check_branch
          %437 = sbr.rel (%p435) target = $region60
        $region59: #{tpu_custom_call.1} parent=51 // pred_region
          %439 = dma.done %s431, 64
        $region60: #{tpu_custom_call.1} parent=51 // pred_fallthru
          _
        %s440 = sand.u32 %s33, 1
        %s441 = scalar_lea.sflag [#allocation6], %s440
        %s442 = sand.u32 %s107, 1
        %s443 = smul.addr %s442, 4
        %s444 = scalar_lea.vmem [#allocation7], %s443
        // Predicated region
        $region61: #{tpu_custom_call.1} parent=51 // pred_check
          %p445 = pneg %p120
        $region62: #{tpu_custom_call.1} parent=51 // pred_check_branch
          %447 = sbr.rel (%p445) target = $region64
        $region63: #{tpu_custom_call.1} parent=51 // pred_region
          %449 = dma.done %s441, 64
        $region64: #{tpu_custom_call.1} parent=51 // pred_fallthru
          _
        %s450 = sand.u32 %s33, 1
        %s451 = scalar_lea.sflag [#allocation9], %s450
        %s452 = sand.u32 %s135, 1
        %s453 = smul.addr %s452, 4
        %s454 = scalar_lea.vmem [#allocation8], %s453
        // Predicated region
        $region65: #{tpu_custom_call.1} parent=51 // pred_check
          %p455 = pneg %p148
        $region66: #{tpu_custom_call.1} parent=51 // pred_check_branch
          %457 = sbr.rel (%p455) target = $region68
        $region67: #{tpu_custom_call.1} parent=51 // pred_region
          %459 = dma.done %s451, 64
        $region68: #{tpu_custom_call.1} parent=51 // pred_fallthru
          _
        // Predicated region
        $region69: #{tpu_custom_call.1} parent=51 // pred_check
          %p460 = pneg %p169
        $region70: #{tpu_custom_call.1} parent=51 // pred_check_branch
          %462 = sbr.rel (%p460) target = $region72
        $region71: #{tpu_custom_call.1} parent=51 // pred_region
          %464 = dma.done [#allocation9], 256
        $region72: #{tpu_custom_call.1} parent=51 // pred_fallthru
          _
        // Predicated region
        $region73: #{tpu_custom_call.1} parent=51 // pred_check
          %p465 = pneg %p190
        $region74: #{tpu_custom_call.1} parent=51 // pred_check_branch
          %467 = sbr.rel (%p465) target = $region76
        $region75: #{tpu_custom_call.1} parent=51 // pred_region
          %469 = dma.done [#allocation12], 256
        $region76: #{tpu_custom_call.1} parent=51 // pred_fallthru
          _
        // Predicated region
        $region77: #{tpu_custom_call.1} parent=51 // pred_check
          %p470 = pneg %p211
        $region78: #{tpu_custom_call.1} parent=51 // pred_check_branch
          %472 = sbr.rel (%p470) target = $region80
        $region79: #{tpu_custom_call.1} parent=51 // pred_region
          %474 = dma.done [#allocation12], 256
        $region80: #{tpu_custom_call.1} parent=51 // pred_fallthru
          _
        // Predicated region
        $region81: #{tpu_custom_call.1} parent=51 // pred_check
          %p475 = pneg %p232
        $region82: #{tpu_custom_call.1} parent=51 // pred_check_branch
          %477 = sbr.rel (%p475) target = $region84
        $region83: #{tpu_custom_call.1} parent=51 // pred_region
          %479 = dma.done [#allocation15], 256
        $region84: #{tpu_custom_call.1} parent=51 // pred_fallthru
          _
        %s480 = sand.u32 %s55, 1
        %s481 = scalar_lea.sflag [#allocation3], %s480
        %s482 = sand.u32 %s55, 1
        %s483 = smul.addr %s482, 4
        %s484 = scalar_lea.vmem [#allocation2], %s483
        %p485 = pneg %p68
        %p486 = pneg %p65
        %s487 = sand.u32 %s33, 1
        %s488 = scalar_lea.sflag [#allocation6], %s487
        %s489 = sand.u32 %s81, 1
        %s490 = smul.addr %s489, 4
        %s491 = scalar_lea.vmem [#allocation5], %s490
        %p492 = pneg %p94
        %p493 = pneg %p91
        %s494 = sand.u32 %s33, 1
        %s495 = scalar_lea.sflag [#allocation6], %s494
        %s496 = sand.u32 %s107, 1
        %s497 = smul.addr %s496, 4
        %s498 = scalar_lea.vmem [#allocation7], %s497
        %p499 = pneg %p120
        %p500 = pneg %p117
        %s501 = sand.u32 %s33, 1
        %s502 = scalar_lea.sflag [#allocation9], %s501
        %s503 = sand.u32 %s135, 1
        %s504 = smul.addr %s503, 4
        %s505 = scalar_lea.vmem [#allocation8], %s504
        %p506 = pneg %p148
        %p507 = pneg %p145
        %p508 = pneg %p169
        %p509 = pneg %p166
        %p510 = pneg %p190
        %p511 = pneg %p187
        %p512 = pneg %p211
        %p513 = pneg %p208
        %p514 = pneg %p232
        %p515 = pneg %p229
        %p516 = pneg %p260
        %p517 = pneg %p257
        %s518 = sand.u32 %s247, 1
        %s519 = scalar_lea.sflag [#allocation4], %s518
        %s520 = sand.u32 %s247, 1
        %s521 = smul.addr %s520, 4
        %s522 = scalar_lea.vmem [#allocation16], %s521
        %v524 = vld [vmem:[%s424] sm:$0xf]
        %v525 = vld [vmem:[%s434] sm:$0xf]
        %v526 = vld [vmem:[%s444] sm:$0xf]
        %v527 = vld [vmem:[%s454] sm:$0xf]
        %v528 = vunpack.c.l.bf16 %v527
        %vm529 = vcmask 64512
        %v531 = vsel %vm529, %v524, 0
        %v534 = vsel %vm529, %v525, 0
        %536 = vmatpush.bf16.xpose.msra.mxu0 0
        %537 = vmatpush.bf16.xpose.msra.mxu0 0
        %538 = vmatpush.bf16.xpose.msra.mxu0 0
        %539 = vmatpush.bf16.xpose.msra.mxu0 0
        %540 = vmatpush.bf16.xpose.msra.mxu0 0
        %541 = vmatpush.bf16.xpose.msra.mxu0 0
        %542 = vmatpush.bf16.xpose.msra.mxu0 0
        %543 = vmatpush.bf16.xpose.msra.mxu0 %v534
        %544 = vmatmul.bf16.gmra.mxu0 %v531
        %v545 = vpop.f32.mrf.mxu0
        %v546 = vadd.f32 0.0, %v545
        %v547 = vpop.f32.mrf.mxu0
        %548 = vdwg.mxu0
        %v550 = vunpack.c.l.b16 %v524
        %v551 = vpack.c.b16 %v550, %v550
        %552 = vrot.lane.b32.xlu0 %v551, 120
        %v553 = vpop.permute.xlu0 %552
        %v555 = vunpack.c.l.b16 %v525
        %v556 = vpack.c.b16 %v555, %v555
        %557 = vrot.lane.b32.xlu0 %v556, 120
        %v558 = vpop.permute.xlu0 %557
        %v560 = vsel %vm529, %v553, 0
        %v563 = vsel %vm529, %v558, 0
        %565 = vmatpush.bf16.xpose.msra.mxu0 0
        %566 = vmatpush.bf16.xpose.msra.mxu0 0
        %567 = vmatpush.bf16.xpose.msra.mxu0 0
        %568 = vmatpush.bf16.xpose.msra.mxu0 0
        %569 = vmatpush.bf16.xpose.msra.mxu0 0
        %570 = vmatpush.bf16.xpose.msra.mxu0 0
        %571 = vmatpush.bf16.xpose.msra.mxu0 0
        %572 = vmatpush.bf16.xpose.msra.mxu0 %v563
        %573 = vmatmul.bf16.gmra.mxu0 %v560
        %v574 = vpop.f32.mrf.mxu0
        %v575 = vadd.f32 0.0, %v574
        %v576 = vpop.f32.mrf.mxu0
        %577 = vdwg.mxu0
        %578 = vrot.lane.b32.xlu0 %v551, 112
        %v579 = vpop.permute.xlu0 %578
        %580 = vrot.lane.b32.xlu0 %v556, 112
        %v581 = vpop.permute.xlu0 %580
        %v583 = vsel %vm529, %v579, 0
        %v586 = vsel %vm529, %v581, 0
        %588 = vmatpush.bf16.xpose.msra.mxu0 0
        %589 = vmatpush.bf16.xpose.msra.mxu0 0
        %590 = vmatpush.bf16.xpose.msra.mxu0 0
        %591 = vmatpush.bf16.xpose.msra.mxu0 0
        %592 = vmatpush.bf16.xpose.msra.mxu0 0
        %593 = vmatpush.bf16.xpose.msra.mxu0 0
        %594 = vmatpush.bf16.xpose.msra.mxu0 0
        %595 = vmatpush.bf16.xpose.msra.mxu0 %v586
        %596 = vmatmul.bf16.gmra.mxu0 %v583
        %v597 = vpop.f32.mrf.mxu0
        %v598 = vadd.f32 0.0, %v597
        %v599 = vpop.f32.mrf.mxu0
        %600 = vdwg.mxu0
        %601 = vrot.lane.b32.xlu0 %v551, 104
        %v602 = vpop.permute.xlu0 %601
        %603 = vrot.lane.b32.xlu0 %v556, 104
        %v604 = vpop.permute.xlu0 %603
        %v606 = vsel %vm529, %v602, 0
        %v609 = vsel %vm529, %v604, 0
        %611 = vmatpush.bf16.xpose.msra.mxu0 0
        %612 = vmatpush.bf16.xpose.msra.mxu0 0
        %613 = vmatpush.bf16.xpose.msra.mxu0 0
        %614 = vmatpush.bf16.xpose.msra.mxu0 0
        %615 = vmatpush.bf16.xpose.msra.mxu0 0
        %616 = vmatpush.bf16.xpose.msra.mxu0 0
        %617 = vmatpush.bf16.xpose.msra.mxu0 0
        %618 = vmatpush.bf16.xpose.msra.mxu0 %v609
        %619 = vmatmul.bf16.gmra.mxu0 %v606
        %v620 = vpop.f32.mrf.mxu0
        %v621 = vadd.f32 0.0, %v620
        %v622 = vpop.f32.mrf.mxu0
        %623 = vdwg.mxu0
        %625 = vrot.lane.b32.xlu0 %v575, 8
        %v626 = vpop.permute.xlu0 %625
        %629 = vrot.lane.b32.xlu0 %v598, 16
        %v630 = vpop.permute.xlu0 %629
        %633 = vrot.lane.b32.xlu0 %v621, 24
        %v634 = vpop.permute.xlu0 %633
        %v636 = vsel %vm529, %v546, %v626
        %vm637 = vcmask 130048
        %v638 = vsel %vm637, %v636, %v630
        %vm639 = vcmask 195584
        %v640 = vsel %vm639, %v638, %v634
        %642 = vrot.lane.b32.xlu0 %v528, 8
        %v643 = vpop.permute.xlu0 %642
        %645 = vrot.lane.b32.xlu0 %v528, 16
        %v646 = vpop.permute.xlu0 %645
        %648 = vrot.lane.b32.xlu0 %v528, 24
        %v649 = vpop.permute.xlu0 %648
        %v651 = vsel %vm529, %v528, %v643
        %v652 = vsel %vm637, %v651, %v646
        %v653 = vsel %vm639, %v652, %v649
        %v654 = vld [vmem:[#allocation10] sm:$0x1]
        %v655 = vperm.slane %v654, 0
        %v656 = vmul.f32 %v640, %v655
        %v657 = vld [vmem:[#allocation11] sm:$0x1]
        %v658 = vperm.slane %v657, 0
        %v659 = vmul.f32 %v653, %v658
        %v660 = vadd.f32 %v656, %v659
        %v661 = vld [vmem:[#allocation13] sm:$0x1]
        %v662 = vperm.slane %v661, 0
        %v663 = vadd.f32 %v660, %v662
        %v664 = vmax.f32 %v663, 0.0
        %v665 = vld [vmem:[#allocation14] sm:$0x1]
        %v666 = vperm.slane %v665, 0
        %v667 = vmul.f32 %v664, %v666
        %v668 = vld [vmem:[#allocation10 + $0x1] sm:$0x1]
        %v669 = vperm.slane %v668, 0
        %v670 = vmul.f32 %v640, %v669
        %v671 = vld [vmem:[#allocation11 + $0x1] sm:$0x1]
        %v672 = vperm.slane %v671, 0
        %v673 = vmul.f32 %v653, %v672
        %v674 = vadd.f32 %v670, %v673
        %v675 = vld [vmem:[#allocation13 + $0x1] sm:$0x1]
        %v676 = vperm.slane %v675, 0
        %v677 = vadd.f32 %v674, %v676
        %v678 = vmax.f32 %v677, 0.0
        %v679 = vld [vmem:[#allocation14 + $0x1] sm:$0x1]
        %v680 = vperm.slane %v679, 0
        %v681 = vmul.f32 %v678, %v680
        %v682 = vadd.f32 %v667, %v681
        %v683 = vld [vmem:[#allocation10 + $0x2] sm:$0x1]
        %v684 = vperm.slane %v683, 0
        %v685 = vmul.f32 %v640, %v684
        %v686 = vld [vmem:[#allocation11 + $0x2] sm:$0x1]
        %v687 = vperm.slane %v686, 0
        %v688 = vmul.f32 %v653, %v687
        %v689 = vadd.f32 %v685, %v688
        %v690 = vld [vmem:[#allocation13 + $0x2] sm:$0x1]
        %v691 = vperm.slane %v690, 0
        %v692 = vadd.f32 %v689, %v691
        %v693 = vmax.f32 %v692, 0.0
        %v694 = vld [vmem:[#allocation14 + $0x2] sm:$0x1]
        %v695 = vperm.slane %v694, 0
        %v696 = vmul.f32 %v693, %v695
        %v697 = vadd.f32 %v682, %v696
        %v698 = vld [vmem:[#allocation10 + $0x3] sm:$0x1]
        %v699 = vperm.slane %v698, 0
        %v700 = vmul.f32 %v640, %v699
        %v701 = vld [vmem:[#allocation11 + $0x3] sm:$0x1]
        %v702 = vperm.slane %v701, 0
        %v703 = vmul.f32 %v653, %v702
        %v704 = vadd.f32 %v700, %v703
        %v705 = vld [vmem:[#allocation13 + $0x3] sm:$0x1]
        %v706 = vperm.slane %v705, 0
        %v707 = vadd.f32 %v704, %v706
        %v708 = vmax.f32 %v707, 0.0
        %v709 = vld [vmem:[#allocation14 + $0x3] sm:$0x1]
        %v710 = vperm.slane %v709, 0
        %v711 = vmul.f32 %v708, %v710
        %v712 = vadd.f32 %v697, %v711
        %v713 = vld [vmem:[#allocation10 + $0x4] sm:$0x1]
        %v714 = vperm.slane %v713, 0
        %v715 = vmul.f32 %v640, %v714
        %v716 = vld [vmem:[#allocation11 + $0x4] sm:$0x1]
        %v717 = vperm.slane %v716, 0
        %v718 = vmul.f32 %v653, %v717
        %v719 = vadd.f32 %v715, %v718
        %v720 = vld [vmem:[#allocation13 + $0x4] sm:$0x1]
        %v721 = vperm.slane %v720, 0
        %v722 = vadd.f32 %v719, %v721
        %v723 = vmax.f32 %v722, 0.0
        %v724 = vld [vmem:[#allocation14 + $0x4] sm:$0x1]
        %v725 = vperm.slane %v724, 0
        %v726 = vmul.f32 %v723, %v725
        %v727 = vadd.f32 %v712, %v726
        %v728 = vld [vmem:[#allocation10 + $0x5] sm:$0x1]
        %v729 = vperm.slane %v728, 0
        %v730 = vmul.f32 %v640, %v729
        %v731 = vld [vmem:[#allocation11 + $0x5] sm:$0x1]
        %v732 = vperm.slane %v731, 0
        %v733 = vmul.f32 %v653, %v732
        %v734 = vadd.f32 %v730, %v733
        %v735 = vld [vmem:[#allocation13 + $0x5] sm:$0x1]
        %v736 = vperm.slane %v735, 0
        %v737 = vadd.f32 %v734, %v736
        %v738 = vmax.f32 %v737, 0.0
        %v739 = vld [vmem:[#allocation14 + $0x5] sm:$0x1]
        %v740 = vperm.slane %v739, 0
        %v741 = vmul.f32 %v738, %v740
        %v742 = vadd.f32 %v727, %v741
        %v743 = vld [vmem:[#allocation10 + $0x6] sm:$0x1]
        %v744 = vperm.slane %v743, 0
        %v745 = vmul.f32 %v640, %v744
        %v746 = vld [vmem:[#allocation11 + $0x6] sm:$0x1]
        %v747 = vperm.slane %v746, 0
        %v748 = vmul.f32 %v653, %v747
        %v749 = vadd.f32 %v745, %v748
        %v750 = vld [vmem:[#allocation13 + $0x6] sm:$0x1]
        %v751 = vperm.slane %v750, 0
        %v752 = vadd.f32 %v749, %v751
        %v753 = vmax.f32 %v752, 0.0
        %v754 = vld [vmem:[#allocation14 + $0x6] sm:$0x1]
        %v755 = vperm.slane %v754, 0
        %v756 = vmul.f32 %v753, %v755
        %v757 = vadd.f32 %v742, %v756
        %v758 = vld [vmem:[#allocation10 + $0x7] sm:$0x1]
        %v759 = vperm.slane %v758, 0
        %v760 = vmul.f32 %v640, %v759
        %v761 = vld [vmem:[#allocation11 + $0x7] sm:$0x1]
        %v762 = vperm.slane %v761, 0
        %v763 = vmul.f32 %v653, %v762
        %v764 = vadd.f32 %v760, %v763
        %v765 = vld [vmem:[#allocation13 + $0x7] sm:$0x1]
        %v766 = vperm.slane %v765, 0
        %v767 = vadd.f32 %v764, %v766
        %v768 = vmax.f32 %v767, 0.0
        %v769 = vld [vmem:[#allocation14 + $0x7] sm:$0x1]
        %v770 = vperm.slane %v769, 0
        %v771 = vmul.f32 %v768, %v770
        %v772 = vadd.f32 %v757, %v771
        %v773 = vld [vmem:[#allocation10 + $0x8] sm:$0x1]
        %v774 = vperm.slane %v773, 0
        %v775 = vmul.f32 %v640, %v774
        %v776 = vld [vmem:[#allocation11 + $0x8] sm:$0x1]
        %v777 = vperm.slane %v776, 0
        %v778 = vmul.f32 %v653, %v777
        %v779 = vadd.f32 %v775, %v778
        %v780 = vld [vmem:[#allocation13 + $0x8] sm:$0x1]
        %v781 = vperm.slane %v780, 0
        %v782 = vadd.f32 %v779, %v781
        %v783 = vmax.f32 %v782, 0.0
        %v784 = vld [vmem:[#allocation14 + $0x8] sm:$0x1]
        %v785 = vperm.slane %v784, 0
        %v786 = vmul.f32 %v783, %v785
        %v787 = vadd.f32 %v772, %v786
        %v788 = vld [vmem:[#allocation10 + $0x9] sm:$0x1]
        %v789 = vperm.slane %v788, 0
        %v790 = vmul.f32 %v640, %v789
        %v791 = vld [vmem:[#allocation11 + $0x9] sm:$0x1]
        %v792 = vperm.slane %v791, 0
        %v793 = vmul.f32 %v653, %v792
        %v794 = vadd.f32 %v790, %v793
        %v795 = vld [vmem:[#allocation13 + $0x9] sm:$0x1]
        %v796 = vperm.slane %v795, 0
        %v797 = vadd.f32 %v794, %v796
        %v798 = vmax.f32 %v797, 0.0
        %v799 = vld [vmem:[#allocation14 + $0x9] sm:$0x1]
        %v800 = vperm.slane %v799, 0
        %v801 = vmul.f32 %v798, %v800
        %v802 = vadd.f32 %v787, %v801
        %v803 = vld [vmem:[#allocation10 + $0xa] sm:$0x1]
        %v804 = vperm.slane %v803, 0
        %v805 = vmul.f32 %v640, %v804
        %v806 = vld [vmem:[#allocation11 + $0xa] sm:$0x1]
        %v807 = vperm.slane %v806, 0
        %v808 = vmul.f32 %v653, %v807
        %v809 = vadd.f32 %v805, %v808
        %v810 = vld [vmem:[#allocation13 + $0xa] sm:$0x1]
        %v811 = vperm.slane %v810, 0
        %v812 = vadd.f32 %v809, %v811
        %v813 = vmax.f32 %v812, 0.0
        %v814 = vld [vmem:[#allocation14 + $0xa] sm:$0x1]
        %v815 = vperm.slane %v814, 0
        %v816 = vmul.f32 %v813, %v815
        %v817 = vadd.f32 %v802, %v816
        %v818 = vld [vmem:[#allocation10 + $0xb] sm:$0x1]
        %v819 = vperm.slane %v818, 0
        %v820 = vmul.f32 %v640, %v819
        %v821 = vld [vmem:[#allocation11 + $0xb] sm:$0x1]
        %v822 = vperm.slane %v821, 0
        %v823 = vmul.f32 %v653, %v822
        %v824 = vadd.f32 %v820, %v823
        %v825 = vld [vmem:[#allocation13 + $0xb] sm:$0x1]
        %v826 = vperm.slane %v825, 0
        %v827 = vadd.f32 %v824, %v826
        %v828 = vmax.f32 %v827, 0.0
        %v829 = vld [vmem:[#allocation14 + $0xb] sm:$0x1]
        %v830 = vperm.slane %v829, 0
        %v831 = vmul.f32 %v828, %v830
        %v832 = vadd.f32 %v817, %v831
        %v833 = vld [vmem:[#allocation10 + $0xc] sm:$0x1]
        %v834 = vperm.slane %v833, 0
        %v835 = vmul.f32 %v640, %v834
        %v836 = vld [vmem:[#allocation11 + $0xc] sm:$0x1]
        %v837 = vperm.slane %v836, 0
        %v838 = vmul.f32 %v653, %v837
        %v839 = vadd.f32 %v835, %v838
        %v840 = vld [vmem:[#allocation13 + $0xc] sm:$0x1]
        %v841 = vperm.slane %v840, 0
        %v842 = vadd.f32 %v839, %v841
        %v843 = vmax.f32 %v842, 0.0
        %v844 = vld [vmem:[#allocation14 + $0xc] sm:$0x1]
        %v845 = vperm.slane %v844, 0
        %v846 = vmul.f32 %v843, %v845
        %v847 = vadd.f32 %v832, %v846
        %v848 = vld [vmem:[#allocation10 + $0xd] sm:$0x1]
        %v849 = vperm.slane %v848, 0
        %v850 = vmul.f32 %v640, %v849
        %v851 = vld [vmem:[#allocation11 + $0xd] sm:$0x1]
        %v852 = vperm.slane %v851, 0
        %v853 = vmul.f32 %v653, %v852
        %v854 = vadd.f32 %v850, %v853
        %v855 = vld [vmem:[#allocation13 + $0xd] sm:$0x1]
        %v856 = vperm.slane %v855, 0
        %v857 = vadd.f32 %v854, %v856
        %v858 = vmax.f32 %v857, 0.0
        %v859 = vld [vmem:[#allocation14 + $0xd] sm:$0x1]
        %v860 = vperm.slane %v859, 0
        %v861 = vmul.f32 %v858, %v860
        %v862 = vadd.f32 %v847, %v861
        %v863 = vld [vmem:[#allocation10 + $0xe] sm:$0x1]
        %v864 = vperm.slane %v863, 0
        %v865 = vmul.f32 %v640, %v864
        %v866 = vld [vmem:[#allocation11 + $0xe] sm:$0x1]
        %v867 = vperm.slane %v866, 0
        %v868 = vmul.f32 %v653, %v867
        %v869 = vadd.f32 %v865, %v868
        %v870 = vld [vmem:[#allocation13 + $0xe] sm:$0x1]
        %v871 = vperm.slane %v870, 0
        %v872 = vadd.f32 %v869, %v871
        %v873 = vmax.f32 %v872, 0.0
        %v874 = vld [vmem:[#allocation14 + $0xe] sm:$0x1]
        %v875 = vperm.slane %v874, 0
        %v876 = vmul.f32 %v873, %v875
        %v877 = vadd.f32 %v862, %v876
        %v878 = vld [vmem:[#allocation10 + $0xf] sm:$0x1]
        %v879 = vperm.slane %v878, 0
        %v880 = vmul.f32 %v640, %v879
        %v881 = vld [vmem:[#allocation11 + $0xf] sm:$0x1]
        %v882 = vperm.slane %v881, 0
        %v883 = vmul.f32 %v653, %v882
        %v884 = vadd.f32 %v880, %v883
        %v885 = vld [vmem:[#allocation13 + $0xf] sm:$0x1]
        %v886 = vperm.slane %v885, 0
        %v887 = vadd.f32 %v884, %v886
        %v888 = vmax.f32 %v887, 0.0
        %v889 = vld [vmem:[#allocation14 + $0xf] sm:$0x1]
        %v890 = vperm.slane %v889, 0
        %v891 = vmul.f32 %v888, %v890
        %v892 = vadd.f32 %v877, %v891
        %vm893 = vcmask 261120
        %v894 = vsel %vm893, %v892, -inf
        %895 = vmax.xlane.f32.xlu0 %v894
        %v896 = vpop.xlane.xlu0 %895
        %v897 = vsub.f32 %v892, %v896
        %v898 = vmul.f32 %v897, 1.442695
        %v899 = vpow.pop %v898
        %v900 = vsel %vm529, %v899, 0.0
        %901 = vadd.xlane.f32.xlu0 %v900
        %v902 = vpop.xlane.xlu0 %901
        %v903 = vrcp.pop %v902
        %v904 = vmul.f32 %v899, %v903
        %v905 = vpack.c.bf16 %v904, %v904
        %v907 = vsel %vm529, %v905, 0
        %vm909 = vcmask 1043456
        %v911 = vsel %vm909, %v526, 0
        %913 = vmatpush.bf16.msra.mxu0 0
        %914 = vmatpush.bf16.msra.mxu0 0
        %915 = vmatpush.bf16.msra.mxu0 0
        %916 = vmatpush.bf16.msra.mxu0 0
        %917 = vmatpush.bf16.msra.mxu0 0
        %918 = vmatpush.bf16.msra.mxu0 0
        %919 = vmatpush.bf16.msra.mxu0 0
        %920 = vmatpush.bf16.msra.mxu0 %v911
        %921 = vmatmul.bf16.gmra.mxu0 %v907
        %v922 = vpop.f32.mrf.mxu0
        %v923 = vadd.f32 0.0, %v922
        %v924 = vpop.f32.mrf.mxu0
        %925 = vdwg.mxu0
        %927 = vrot.lane.b32.xlu0 %v899, 120
        %v928 = vpop.permute.xlu0 %927
        %v930 = vsel %vm529, %v928, 0.0
        %931 = vadd.xlane.f32.xlu0 %v930
        %v932 = vpop.xlane.xlu0 %931
        %v933 = vrcp.pop %v932
        %v934 = vmul.f32 %v899, %v933
        %v935 = vpack.c.bf16 %v934, %v934
        %937 = vrot.lane.b32.xlu0 %v935, 120
        %v938 = vpop.permute.xlu0 %937
        %v940 = vunpack.c.l.b16 %v526
        %v941 = vpack.c.b16 %v940, %v940
        %942 = vrot.lane.b32.xlu0 %v941, 120
        %v943 = vpop.permute.xlu0 %942
        %v945 = vsel %vm529, %v938, 0
        %v948 = vsel %vm909, %v943, 0
        %950 = vmatpush.bf16.msra.mxu0 0
        %951 = vmatpush.bf16.msra.mxu0 0
        %952 = vmatpush.bf16.msra.mxu0 0
        %953 = vmatpush.bf16.msra.mxu0 0
        %954 = vmatpush.bf16.msra.mxu0 0
        %955 = vmatpush.bf16.msra.mxu0 0
        %956 = vmatpush.bf16.msra.mxu0 0
        %957 = vmatpush.bf16.msra.mxu0 %v948
        %958 = vmatmul.bf16.gmra.mxu0 %v945
        %v959 = vpop.f32.mrf.mxu0
        %v960 = vadd.f32 0.0, %v959
        %v961 = vpop.f32.mrf.mxu0
        %962 = vdwg.mxu0
        %963 = vrot.lane.b32.xlu0 %v899, 112
        %v964 = vpop.permute.xlu0 %963
        %v966 = vsel %vm529, %v964, 0.0
        %967 = vadd.xlane.f32.xlu0 %v966
        %v968 = vpop.xlane.xlu0 %967
        %v969 = vrcp.pop %v968
        %v970 = vmul.f32 %v899, %v969
        %v971 = vpack.c.bf16 %v970, %v970
        %973 = vrot.lane.b32.xlu0 %v971, 112
        %v974 = vpop.permute.xlu0 %973
        %975 = vrot.lane.b32.xlu0 %v941, 112
        %v976 = vpop.permute.xlu0 %975
        %v978 = vsel %vm529, %v974, 0
        %v981 = vsel %vm909, %v976, 0
        %983 = vmatpush.bf16.msra.mxu0 0
        %984 = vmatpush.bf16.msra.mxu0 0
        %985 = vmatpush.bf16.msra.mxu0 0
        %986 = vmatpush.bf16.msra.mxu0 0
        %987 = vmatpush.bf16.msra.mxu0 0
        %988 = vmatpush.bf16.msra.mxu0 0
        %989 = vmatpush.bf16.msra.mxu0 0
        %990 = vmatpush.bf16.msra.mxu0 %v981
        %991 = vmatmul.bf16.gmra.mxu0 %v978
        %v992 = vpop.f32.mrf.mxu0
        %v993 = vadd.f32 0.0, %v992
        %v994 = vpop.f32.mrf.mxu0
        %995 = vdwg.mxu0
        %996 = vrot.lane.b32.xlu0 %v899, 104
        %v997 = vpop.permute.xlu0 %996
        %v999 = vsel %vm529, %v997, 0.0
        %1000 = vadd.xlane.f32.xlu0 %v999
        %v1001 = vpop.xlane.xlu0 %1000
        %v1002 = vrcp.pop %v1001
        %v1003 = vmul.f32 %v899, %v1002
        %v1004 = vpack.c.bf16 %v1003, %v1003
        %1006 = vrot.lane.b32.xlu0 %v1004, 104
        %v1007 = vpop.permute.xlu0 %1006
        %1008 = vrot.lane.b32.xlu0 %v941, 104
        %v1009 = vpop.permute.xlu0 %1008
        %v1011 = vsel %vm529, %v1007, 0
        %v1014 = vsel %vm909, %v1009, 0
        %1016 = vmatpush.bf16.msra.mxu0 0
        %1017 = vmatpush.bf16.msra.mxu0 0
        %1018 = vmatpush.bf16.msra.mxu0 0
        %1019 = vmatpush.bf16.msra.mxu0 0
        %1020 = vmatpush.bf16.msra.mxu0 0
        %1021 = vmatpush.bf16.msra.mxu0 0
        %1022 = vmatpush.bf16.msra.mxu0 0
        %1023 = vmatpush.bf16.msra.mxu0 %v1014
        %1024 = vmatmul.bf16.gmra.mxu0 %v1011
        %v1025 = vpop.f32.mrf.mxu0
        %v1026 = vadd.f32 0.0, %v1025
        %v1027 = vpop.f32.mrf.mxu0
        %1028 = vdwg.mxu0
        %1030 = vrot.lane.b32.xlu0 %v960, 8
        %v1031 = vpop.permute.xlu0 %1030
        %1034 = vrot.lane.b32.xlu0 %v993, 16
        %v1035 = vpop.permute.xlu0 %1034
        %1038 = vrot.lane.b32.xlu0 %v1026, 24
        %v1039 = vpop.permute.xlu0 %1038
        %v1041 = vsel %vm529, %v923, %v1031
        %v1042 = vsel %vm637, %v1041, %v1035
        %v1043 = vsel %vm639, %v1042, %v1039
        %v1044 = vpack.c.bf16 %v1043, %v1043
        %vm1045 = vcmask 257024
        %1046 = vst.msk [vmem:[%s522] sm:$0xf] %vm1045, %v1044
        %s1047 = sand.u32 %s247, 1
        %s1048 = scalar_lea.sflag [#allocation4], %s1047
        %s1049 = sand.u32 %s247, 1
        %s1050 = smul.addr %s1049, 4
        %s1051 = scalar_lea.vmem [#allocation16], %s1050
        // Predicated region
        $region85: #{tpu_custom_call.1} parent=51 // pred_check
          %p1052 = pneg %p257
        $region86: #{tpu_custom_call.1} parent=51 // pred_check_branch
          %1054 = sbr.rel (%p1052) target = $region88
        $region87: #{tpu_custom_call.1} parent=51 // pred_region
          %1056 = vsyncadd %s1048, 0
          %s1057 = sadd.s32 %s38, %s37
          %s1058 = smul.addr %s1057, 4
          %s1059 = scalar_lea.hbm %s8, %s1058
          %s1061 = sshll.u32 %s1051, 4
          %s1062 = int_to_ptr.vmem [resolvable:$true] %s1061
          %s1063 = sshll.u32 %s1059, 4
          %s1064 = int_to_ptr.hbm [resolvable:$true] %s1063
          %1066 = dma.vmem_to_hbm [thread:$0]  %s1062, 64, %s1064, %s1048
        $region88: #{tpu_custom_call.1} parent=51 // pred_fallthru
          _
      $region52: #{tpu_custom_call.1} parent=5 // pred_fallthru
        _
      %p1067 = scmp.le.s32.totalorder 2, %s28
      // Predicated region
      $region89: #{tpu_custom_call.1} parent=5 // pred_check
        %p1068 = pneg %p1067
      $region90: #{tpu_custom_call.1} parent=5 // pred_check_branch
        %1070 = sbr.rel (%p1068) target = $region92
      $region91: #{tpu_custom_call.1} parent=5 // pred_region
        %s1071 = ssub.s32 %s28, 2
        // Predicated region
        $region93: #{tpu_custom_call.1} parent=91 // pred_check
          %p1072 = pneg %p263
        $region94: #{tpu_custom_call.1} parent=91 // pred_check_branch
          %1074 = sbr.rel (%p1072) target = $region96
        $region95: #{tpu_custom_call.1} parent=91 // pred_region
          %s1075 = sand.u32 %s248, 1
          %s1076 = scalar_lea.sflag [#allocation4], %s1075
          %s1077 = sand.u32 %s248, 1
          %s1078 = smul.addr %s1077, 4
          %s1079 = scalar_lea.vmem [#allocation16], %s1078
          %1081 = dma.done %s1076, 64
        $region96: #{tpu_custom_call.1} parent=91 // pred_fallthru
          _
      $region92: #{tpu_custom_call.1} parent=5 // pred_fallthru
        _
    $region6: #{tpu_custom_call.1} parent=1 // loop_footer
      %s32 = sadd.s32 1, %s28
    $region7: #{tpu_custom_call.1} parent=1 // loop_footer_branch
      %27 = sbr.rel target = $region3
    $region8: #{tpu_custom_call.1} parent=1 // loop_exit
      _
    %1082 = vsyncpa [#allocation3], 1
    %s1083 = scalar_lea.sflag [#allocation3], 1
    %1084 = vsyncpa %s1083, 1
    %1085 = vsyncpa [#allocation6], 1
    %s1086 = scalar_lea.sflag [#allocation6], 1
    %1087 = vsyncpa %s1086, 1
    %1088 = vsyncpa [#allocation9], 1
    %s1089 = scalar_lea.sflag [#allocation9], 1
    %1090 = vsyncpa %s1089, 1
    %1091 = vsyncpa [#allocation12], 1
    %1092 = vsyncpa [#allocation15], 1
    %1093 = vsyncpa [#allocation4], 1
    %s1094 = scalar_lea.sflag [#allocation4], 1
    %1095 = vsyncpa %s1094, 1

</llo_original>
